<compile_context>
chip_gen: v7x
topology: tpu7x:2x2x1
jax: 0.10.0
libtpu: 0.0.40
codegen_flags: <defaults>
</compile_context>

<pallas_src>
import jax
import jax.numpy as jnp
from jax.experimental import pallas as pl
from jax.experimental.pallas import tpu as pltpu

EPS = 1e-5        # nn.BatchNorm3d default eps
_FMA_MAX_C = 8    # VPU-FMA vs MXU crossover for the 1x1x1 channel mix


def _vmem_limit_bytes():
    """Per-generation VMEM budget: ~75% of physical capacity as headroom."""
    try:
        cap = int(pltpu.get_tpu_info().vmem_capacity_bytes)
    except Exception:
        cap = 64 * 1024 * 1024          # conservative fallback (v7x physical)
    return max(16 * 1024 * 1024, (cap * 3) // 4)


def _channel_mix(w, x, nchan):
    """Pointwise (1x1x1) conv == per-pixel channel mix of a (C, P) tile.

    For tiny C this is C broadcast FMAs on the VPU (a C<=8 contraction wastes
    the MXU and pays push/pop latency); above the crossover use the MXU.
    """
    # TODO(synk): a stride-0 sublane-broadcast load (ref[pl.ds(k, C, stride=0), :])
    # would move the per-k broadcast into the vector-load slot; kept as a plain
    # VPU broadcast here since the kernel is HBM-bound at these channel counts.
    if nchan <= _FMA_MAX_C:
        y = w[:, 0:1] * x[0:1, :]
        for k in range(1, nchan):
            y = y + w[:, k:k + 1] * x[k:k + 1, :]
        return y
    return jnp.dot(w, x, preferred_element_type=jnp.float32)


# --------------------------- fast (VMEM-resident) path -----------------------

def _make_fused_kernel(nbatch, nchan, npix):
    inv_n = 1.0 / float(nbatch * npix)

    def kernel(x_ref, w_ref, g_ref, beta_ref, o_ref):
        w = w_ref[...]
        # Pass 1: channel mix + per-channel sums (kept resident in vregs/VMEM).
        ys = []
        csum = jnp.zeros((nchan, 1), jnp.float32)
        for b in range(nbatch):
            yb = _channel_mix(w, x_ref[b], nchan)          # (C, P)
            ys.append(yb)
            csum = csum + jnp.sum(yb, axis=1, keepdims=True)
        mean = csum * inv_n                                  # (C, 1)
        # Pass 2: exact two-pass biased variance -- data is VMEM-resident, so
        # this costs no extra HBM traffic and avoids E[y^2]-E[y]^2 cancellation.
        cvar = jnp.zeros((nchan, 1), jnp.float32)
        for yb in ys:
            d = yb - mean
            cvar = cvar + jnp.sum(d * d, axis=1, keepdims=True)
        var = cvar * inv_n
        scale = jax.lax.rsqrt(var + EPS) * g_ref[...]        # (C, 1)
        shift = beta_ref[...] - mean * scale                 # (C, 1)
        # Pass 3: normalize + residual + ReLU, single lane-dense store.
        for b in range(nbatch):
            o_ref[b] = jnp.maximum(ys[b] * scale + shift + x_ref[b], 0.0)

    return kernel


# ------------------------------ streaming path -------------------------------

def _make_stats_kernel(nchan, npix, tile, ragged):
    def kernel(x_ref, w_ref, sum_ref, sq_ref):
        y = _channel_mix(w_ref[...], x_ref[0], nchan)        # (C, tile)
        if ragged:
            # Last pixel tile extends past npix; padding values are undefined,
            # so mask them out of the statistics.
            t = pl.program_id(1)
            lane = jax.lax.broadcasted_iota(jnp.int32, y.shape, 1)
            y = jnp.where(lane < (npix - t * tile), y, 0.0)
        sum_ref[0, 0] = jnp.sum(y, axis=1, keepdims=True)
        sq_ref[0, 0] = jnp.sum(y * y, axis=1, keepdims=True)

    return kernel


def _make_norm_kernel(nchan):
    def kernel(x_ref, w_ref, scale_ref, shift_ref, o_ref):
        x = x_ref[0]                                         # (C, tile)
        y = _channel_mix(w_ref[...], x, nchan)
        # batchnorm (precomputed scale/shift) + residual + relu, lane-dense.
        o_ref[0] = jnp.maximum(y * scale_ref[...] + shift_ref[...] + x, 0.0)

    return kernel


def _pick_pixel_tile(npix, nchan, vmem_limit):
    """Pixel tile (multiple of 128) sized from the per-generation VMEM budget.

    Budget ~ (limit - residents)/8: double-buffered input + output tiles plus
    in-kernel intermediates with headroom.  Returns (tile, num_tiles, ragged).
    """
    resident = nchan * nchan * 4 + 4 * nchan * 4 + (64 << 10)
    per_tile_budget = max(512 * 4 * nchan, (vmem_limit - resident) // 8)
    # >= 512 lanes already hits ~85% of HBM roofline; cap to bound the search.
    per_tile_budget = min(per_tile_budget, 4 * 1024 * 1024)
    max_lanes = max(128, (per_tile_budget // (4 * nchan)) // 128 * 128)
    if npix <= max_lanes:
        return npix, 1, False                    # single tile covers all pixels
    t = min(max_lanes, (npix // 128) * 128)
    while t >= 128:                              # largest 128-multiple divisor
        if npix % t == 0:
            return t, npix // t, False
        t -= 128
    # No suitable divisor: fixed tile + masked ragged tail (never exceeds budget).
    num = -(-npix // max_lanes)
    return max_lanes, num, True


# --------------------------------- wrapper ------------------------------------

def adapter_forward(x, w, b, gamma, beta, *, force_streaming=False):
    """ReLU(BatchNorm3d(conv1x1(x)) + x) with training-mode batch statistics.

    x: (B, C, F, H, W) float32 (NCDHW).  w: (C, C) 1x1x1 conv weight.
    b: (C,) conv bias.  gamma/beta: (C,) BatchNorm affine parameters.
    """
    # Per-channel constant bias is removed exactly by the BN mean subtraction.
    del b
    # TODO(synk): training-mode BatchNorm3d also updates running_mean/var; the
    # batch mean/var are computed here but not exposed through this API.
    B, C, F, H, W = x.shape
    npix = F * H * W
    x3 = x.reshape(B, C, npix)                  # pure reshape, no data movement
    vmem_limit = _vmem_limit_bytes()
    array_bytes = B * C * npix * 4

    if (not force_streaming) and (4 * array_bytes <= vmem_limit):
        # ---------- fast path: whole problem resident in VMEM, single pass ----
        out3 = pl.pallas_call(
            _make_fused_kernel(B, C, npix),
            out_shape=jax.ShapeDtypeStruct((B, C, npix), jnp.float32),
            compiler_params=pltpu.CompilerParams(vmem_limit_bytes=vmem_limit),
        )(x3, w, gamma.reshape(C, 1), beta.reshape(C, 1))
        return out3.reshape(B, C, F, H, W)

    # --------------- streaming path: two fully-parallel pallas_calls ----------
    tile, T, ragged = _pick_pixel_tile(npix, C, vmem_limit)

    psum, psq = pl.pallas_call(
        _make_stats_kernel(C, npix, tile, ragged),
        out_shape=(jax.ShapeDtypeStruct((B, T, C, 1), jnp.float32),
                   jax.ShapeDtypeStruct((B, T, C, 1), jnp.float32)),
        grid_spec=pltpu.PrefetchScalarGridSpec(
            num_scalar_prefetch=0,
            grid=(B, T),
            in_specs=[
                pl.BlockSpec((1, C, tile), lambda bb, t: (bb, 0, t)),
                pl.BlockSpec((C, C), lambda bb, t: (0, 0)),        # resident
            ],
            out_specs=[
                pl.BlockSpec((1, 1, C, 1), lambda bb, t: (bb, t, 0, 0)),
                pl.BlockSpec((1, 1, C, 1), lambda bb, t: (bb, t, 0, 0)),
            ],
        ),
        compiler_params=pltpu.CompilerParams(
            dimension_semantics=("parallel", "parallel"),
            vmem_limit_bytes=vmem_limit,
        ),
    )(x3, w)

    # Finalize BN statistics once in JAX (tree reduction over per-tile partials
    # rather than a long serial in-kernel += chain).
    n_total = float(B * npix)
    mean = jnp.sum(psum, axis=(0, 1)) / n_total                    # (C, 1)
    # TODO(synk): E[y^2]-E[y]^2 can cancel when |mean| >> std; clamped at zero
    # here -- a shifted / Welford combine of the tile partials would be sturdier.
    var = jnp.maximum(jnp.sum(psq, axis=(0, 1)) / n_total - mean * mean, 0.0)
    scale = jax.lax.rsqrt(var + EPS) * gamma.reshape(C, 1)
    shift = beta.reshape(C, 1) - mean * scale

    out3 = pl.pallas_call(
        _make_norm_kernel(C),
        out_shape=jax.ShapeDtypeStruct((B, C, npix), jnp.float32),
        grid_spec=pltpu.PrefetchScalarGridSpec(
            num_scalar_prefetch=0,
            grid=(B, T),
            in_specs=[
                pl.BlockSpec((1, C, tile), lambda bb, t: (bb, 0, t)),
                pl.BlockSpec((C, C), lambda bb, t: (0, 0)),        # resident
                pl.BlockSpec((C, 1), lambda bb, t: (0, 0)),        # resident
                pl.BlockSpec((C, 1), lambda bb, t: (0, 0)),        # resident
            ],
            out_specs=pl.BlockSpec((1, C, tile), lambda bb, t: (bb, 0, t)),
        ),
        compiler_params=pltpu.CompilerParams(
            dimension_semantics=("parallel", "parallel"),
            vmem_limit_bytes=vmem_limit,
        ),
    )(x3, w, scale, shift)

    return out3.reshape(B, C, F, H, W)


def adapter_reference(x, w, b, gamma, beta):
    """Pure-JAX reference of the same forward pass (NCDHW, training-mode BN)."""
    y = jnp.einsum("oc,bcfhw->bofhw", w, x) + b[None, :, None, None, None]
    mean = jnp.mean(y, axis=(0, 2, 3, 4), keepdims=True)
    var = jnp.mean((y - mean) ** 2, axis=(0, 2, 3, 4), keepdims=True)   # biased
    y = (y - mean) * jax.lax.rsqrt(var + EPS)
    y = y * gamma[None, :, None, None, None] + beta[None, :, None, None, None]
    return jnp.maximum(y + x, 0.0)


if __name__ == "__main__":
    # small shapes: batch=2, channels=4, frames=8, spatial=16x16
    B, C, F, H, W = 2, 4, 8, 16, 16

    key = jax.random.PRNGKey(0)
    kx, kw, kb, kg, kbt = jax.random.split(key, 5)

    x = jax.random.normal(kx, (B, C, F, H, W), dtype=jnp.float32)

    # deterministic synthetic parameters (shapes implied by the module defn)
    w = jax.random.normal(kw, (C, C), dtype=jnp.float32) * 0.1    # conv1 weight
    b = jax.random.normal(kb, (C,), dtype=jnp.float32) * 0.1      # conv1 bias
    gamma = 1.0 + 0.1 * jax.random.normal(kg, (C,), dtype=jnp.float32)  # BN weight
    beta = 0.1 * jax.random.normal(kbt, (C,), dtype=jnp.float32)        # BN bias

    ref = adapter_reference(x, w, b, gamma, beta)

    # fast (VMEM-resident, single-pass) path
    out = jax.block_until_ready(adapter_forward(x, w, b, gamma, beta))
    assert out.shape == (B, C, F, H, W)
    assert jnp.allclose(out, ref, atol=1e-4, rtol=1e-4), "fast path mismatch"

    # streaming (two-call, parallel-grid) path, forced on the same small input
    out_s = jax.block_until_ready(
        adapter_forward(x, w, b, gamma, beta, force_streaming=True))
    assert jnp.allclose(out_s, ref, atol=1e-4, rtol=1e-4), "streaming path mismatch"

    print("KERNEL_OK")
</pallas_src>

<mosaic_0001>
module attributes {stable_mosaic.version = 11 : i64} {
  func.func @kernel(%arg0: memref<2x4x2048xf32, #tpu.memory_space<vmem>>, %arg1: memref<4x4xf32, #tpu.memory_space<vmem>>, %arg2: memref<4x1xf32, #tpu.memory_space<vmem>>, %arg3: memref<4x1xf32, #tpu.memory_space<vmem>>, %arg4: memref<2x4x2048xf32, #tpu.memory_space<vmem>>) attributes {dimension_semantics = [], scalar_prefetch = 0 : i64, scratch_operands = 0 : i64, tpu.core_type = #tpu.core_type<tc>} {
    %c0 = arith.constant 0 : index
    %c0_0 = arith.constant 0 : index
    %0 = vector.load %arg1[%c0, %c0_0] : memref<4x4xf32, #tpu.memory_space<vmem>>, vector<4x4xf32>
    %cst = arith.constant 0.000000e+00 : f32
    %1 = vector.broadcast %cst : f32 to vector<4x1xf32>
    %c0_1 = arith.constant 0 : index
    %c0_2 = arith.constant 0 : index
    %c0_3 = arith.constant 0 : index
    %2 = vector.load %arg0[%c0_1, %c0_2, %c0_3] : memref<2x4x2048xf32, #tpu.memory_space<vmem>>, vector<1x4x2048xf32>
    %3 = vector.shape_cast %2 : vector<1x4x2048xf32> to vector<4x2048xf32>
    %4 = vector.extract_strided_slice %0 {offsets = [0, 0], sizes = [4, 1], strides = [1, 1]} : vector<4x4xf32> to vector<4x1xf32>
    %5 = vector.extract_strided_slice %3 {offsets = [0, 0], sizes = [1, 2048], strides = [1, 1]} : vector<4x2048xf32> to vector<1x2048xf32>
    %6 = vector.broadcast %4 : vector<4x1xf32> to vector<4x2048xf32>
    %7 = vector.broadcast %5 : vector<1x2048xf32> to vector<4x2048xf32>
    %8 = arith.mulf %6, %7 : vector<4x2048xf32>
    %9 = vector.extract_strided_slice %0 {offsets = [0, 1], sizes = [4, 1], strides = [1, 1]} : vector<4x4xf32> to vector<4x1xf32>
    %10 = vector.extract_strided_slice %3 {offsets = [1, 0], sizes = [1, 2048], strides = [1, 1]} : vector<4x2048xf32> to vector<1x2048xf32>
    %11 = vector.broadcast %9 : vector<4x1xf32> to vector<4x2048xf32>
    %12 = vector.broadcast %10 : vector<1x2048xf32> to vector<4x2048xf32>
    %13 = arith.mulf %11, %12 : vector<4x2048xf32>
    %14 = arith.addf %8, %13 : vector<4x2048xf32>
    %15 = vector.extract_strided_slice %0 {offsets = [0, 2], sizes = [4, 1], strides = [1, 1]} : vector<4x4xf32> to vector<4x1xf32>
    %16 = vector.extract_strided_slice %3 {offsets = [2, 0], sizes = [1, 2048], strides = [1, 1]} : vector<4x2048xf32> to vector<1x2048xf32>
    %17 = vector.broadcast %15 : vector<4x1xf32> to vector<4x2048xf32>
    %18 = vector.broadcast %16 : vector<1x2048xf32> to vector<4x2048xf32>
    %19 = arith.mulf %17, %18 : vector<4x2048xf32>
    %20 = arith.addf %14, %19 : vector<4x2048xf32>
    %21 = vector.extract_strided_slice %0 {offsets = [0, 3], sizes = [4, 1], strides = [1, 1]} : vector<4x4xf32> to vector<4x1xf32>
    %22 = vector.extract_strided_slice %3 {offsets = [3, 0], sizes = [1, 2048], strides = [1, 1]} : vector<4x2048xf32> to vector<1x2048xf32>
    %23 = vector.broadcast %21 : vector<4x1xf32> to vector<4x2048xf32>
    %24 = vector.broadcast %22 : vector<1x2048xf32> to vector<4x2048xf32>
    %25 = arith.mulf %23, %24 : vector<4x2048xf32>
    %26 = arith.addf %20, %25 : vector<4x2048xf32>
    %cst_4 = arith.constant dense<0.000000e+00> : vector<4xf32>
    %27 = vector.multi_reduction <add>, %26, %cst_4 [1] : vector<4x2048xf32> to vector<4xf32>
    %28 = vector.shape_cast %27 : vector<4xf32> to vector<4x1xf32>
    %29 = arith.addf %1, %28 : vector<4x1xf32>
    %c1 = arith.constant 1 : index
    %c0_5 = arith.constant 0 : index
    %c0_6 = arith.constant 0 : index
    %30 = vector.load %arg0[%c1, %c0_5, %c0_6] : memref<2x4x2048xf32, #tpu.memory_space<vmem>>, vector<1x4x2048xf32>
    %31 = vector.shape_cast %30 : vector<1x4x2048xf32> to vector<4x2048xf32>
    %32 = vector.extract_strided_slice %0 {offsets = [0, 0], sizes = [4, 1], strides = [1, 1]} : vector<4x4xf32> to vector<4x1xf32>
    %33 = vector.extract_strided_slice %31 {offsets = [0, 0], sizes = [1, 2048], strides = [1, 1]} : vector<4x2048xf32> to vector<1x2048xf32>
    %34 = vector.broadcast %32 : vector<4x1xf32> to vector<4x2048xf32>
    %35 = vector.broadcast %33 : vector<1x2048xf32> to vector<4x2048xf32>
    %36 = arith.mulf %34, %35 : vector<4x2048xf32>
    %37 = vector.extract_strided_slice %0 {offsets = [0, 1], sizes = [4, 1], strides = [1, 1]} : vector<4x4xf32> to vector<4x1xf32>
    %38 = vector.extract_strided_slice %31 {offsets = [1, 0], sizes = [1, 2048], strides = [1, 1]} : vector<4x2048xf32> to vector<1x2048xf32>
    %39 = vector.broadcast %37 : vector<4x1xf32> to vector<4x2048xf32>
    %40 = vector.broadcast %38 : vector<1x2048xf32> to vector<4x2048xf32>
    %41 = arith.mulf %39, %40 : vector<4x2048xf32>
    %42 = arith.addf %36, %41 : vector<4x2048xf32>
    %43 = vector.extract_strided_slice %0 {offsets = [0, 2], sizes = [4, 1], strides = [1, 1]} : vector<4x4xf32> to vector<4x1xf32>
    %44 = vector.extract_strided_slice %31 {offsets = [2, 0], sizes = [1, 2048], strides = [1, 1]} : vector<4x2048xf32> to vector<1x2048xf32>
    %45 = vector.broadcast %43 : vector<4x1xf32> to vector<4x2048xf32>
    %46 = vector.broadcast %44 : vector<1x2048xf32> to vector<4x2048xf32>
    %47 = arith.mulf %45, %46 : vector<4x2048xf32>
    %48 = arith.addf %42, %47 : vector<4x2048xf32>
    %49 = vector.extract_strided_slice %0 {offsets = [0, 3], sizes = [4, 1], strides = [1, 1]} : vector<4x4xf32> to vector<4x1xf32>
    %50 = vector.extract_strided_slice %31 {offsets = [3, 0], sizes = [1, 2048], strides = [1, 1]} : vector<4x2048xf32> to vector<1x2048xf32>
    %51 = vector.broadcast %49 : vector<4x1xf32> to vector<4x2048xf32>
    %52 = vector.broadcast %50 : vector<1x2048xf32> to vector<4x2048xf32>
    %53 = arith.mulf %51, %52 : vector<4x2048xf32>
    %54 = arith.addf %48, %53 : vector<4x2048xf32>
    %cst_7 = arith.constant dense<0.000000e+00> : vector<4xf32>
    %55 = vector.multi_reduction <add>, %54, %cst_7 [1] : vector<4x2048xf32> to vector<4xf32>
    %56 = vector.shape_cast %55 : vector<4xf32> to vector<4x1xf32>
    %57 = arith.addf %29, %56 : vector<4x1xf32>
    %cst_8 = arith.constant 2.44140625E-4 : f32
    %58 = vector.broadcast %cst_8 : f32 to vector<4x1xf32>
    %59 = arith.mulf %57, %58 : vector<4x1xf32>
    %cst_9 = arith.constant 0.000000e+00 : f32
    %60 = vector.broadcast %cst_9 : f32 to vector<4x1xf32>
    %61 = vector.broadcast %59 : vector<4x1xf32> to vector<4x2048xf32>
    %62 = arith.subf %26, %61 : vector<4x2048xf32>
    %63 = arith.mulf %62, %62 : vector<4x2048xf32>
    %cst_10 = arith.constant dense<0.000000e+00> : vector<4xf32>
    %64 = vector.multi_reduction <add>, %63, %cst_10 [1] : vector<4x2048xf32> to vector<4xf32>
    %65 = vector.shape_cast %64 : vector<4xf32> to vector<4x1xf32>
    %66 = arith.addf %60, %65 : vector<4x1xf32>
    %67 = vector.broadcast %59 : vector<4x1xf32> to vector<4x2048xf32>
    %68 = arith.subf %54, %67 : vector<4x2048xf32>
    %69 = arith.mulf %68, %68 : vector<4x2048xf32>
    %cst_11 = arith.constant dense<0.000000e+00> : vector<4xf32>
    %70 = vector.multi_reduction <add>, %69, %cst_11 [1] : vector<4x2048xf32> to vector<4xf32>
    %71 = vector.shape_cast %70 : vector<4xf32> to vector<4x1xf32>
    %72 = arith.addf %66, %71 : vector<4x1xf32>
    %cst_12 = arith.constant 2.44140625E-4 : f32
    %73 = vector.broadcast %cst_12 : f32 to vector<4x1xf32>
    %74 = arith.mulf %72, %73 : vector<4x1xf32>
    %cst_13 = arith.constant 9.99999974E-6 : f32
    %75 = vector.broadcast %cst_13 : f32 to vector<4x1xf32>
    %76 = arith.addf %74, %75 : vector<4x1xf32>
    %77 = math.rsqrt %76 : vector<4x1xf32>
    %c0_14 = arith.constant 0 : index
    %c0_15 = arith.constant 0 : index
    %78 = vector.load %arg2[%c0_14, %c0_15] : memref<4x1xf32, #tpu.memory_space<vmem>>, vector<4x1xf32>
    %79 = arith.mulf %77, %78 : vector<4x1xf32>
    %c0_16 = arith.constant 0 : index
    %c0_17 = arith.constant 0 : index
    %80 = vector.load %arg3[%c0_16, %c0_17] : memref<4x1xf32, #tpu.memory_space<vmem>>, vector<4x1xf32>
    %81 = arith.mulf %59, %79 : vector<4x1xf32>
    %82 = arith.subf %80, %81 : vector<4x1xf32>
    %83 = vector.broadcast %79 : vector<4x1xf32> to vector<4x2048xf32>
    %84 = arith.mulf %26, %83 : vector<4x2048xf32>
    %85 = vector.broadcast %82 : vector<4x1xf32> to vector<4x2048xf32>
    %86 = arith.addf %84, %85 : vector<4x2048xf32>
    %c0_18 = arith.constant 0 : index
    %c0_19 = arith.constant 0 : index
    %c0_20 = arith.constant 0 : index
    %87 = vector.load %arg0[%c0_18, %c0_19, %c0_20] : memref<2x4x2048xf32, #tpu.memory_space<vmem>>, vector<1x4x2048xf32>
    %88 = vector.shape_cast %87 : vector<1x4x2048xf32> to vector<4x2048xf32>
    %89 = arith.addf %86, %88 : vector<4x2048xf32>
    %cst_21 = arith.constant 0.000000e+00 : f32
    %90 = vector.broadcast %cst_21 : f32 to vector<4x2048xf32>
    %91 = arith.maximumf %89, %90 : vector<4x2048xf32>
    %c0_22 = arith.constant 0 : index
    %c0_23 = arith.constant 0 : index
    %c0_24 = arith.constant 0 : index
    %92 = vector.load %arg4[%c0_22, %c0_23, %c0_24] : memref<2x4x2048xf32, #tpu.memory_space<vmem>>, vector<1x4x2048xf32>
    %93 = vector.shape_cast %92 : vector<1x4x2048xf32> to vector<4x2048xf32>
    %94 = vector.shape_cast %91 : vector<4x2048xf32> to vector<1x4x2048xf32>
    tpu.vector_store %arg4[%c0_22, %c0_23, %c0_24], %94 {strides = array<i32>} : memref<2x4x2048xf32, #tpu.memory_space<vmem>>, vector<1x4x2048xf32>,
    %95 = vector.broadcast %79 : vector<4x1xf32> to vector<4x2048xf32>
    %96 = arith.mulf %54, %95 : vector<4x2048xf32>
    %97 = vector.broadcast %82 : vector<4x1xf32> to vector<4x2048xf32>
    %98 = arith.addf %96, %97 : vector<4x2048xf32>
    %c1_25 = arith.constant 1 : index
    %c0_26 = arith.constant 0 : index
    %c0_27 = arith.constant 0 : index
    %99 = vector.load %arg0[%c1_25, %c0_26, %c0_27] : memref<2x4x2048xf32, #tpu.memory_space<vmem>>, vector<1x4x2048xf32>
    %100 = vector.shape_cast %99 : vector<1x4x2048xf32> to vector<4x2048xf32>
    %101 = arith.addf %98, %100 : vector<4x2048xf32>
    %cst_28 = arith.constant 0.000000e+00 : f32
    %102 = vector.broadcast %cst_28 : f32 to vector<4x2048xf32>
    %103 = arith.maximumf %101, %102 : vector<4x2048xf32>
    %c1_29 = arith.constant 1 : index
    %c0_30 = arith.constant 0 : index
    %c0_31 = arith.constant 0 : index
    %104 = vector.load %arg4[%c1_29, %c0_30, %c0_31] : memref<2x4x2048xf32, #tpu.memory_space<vmem>>, vector<1x4x2048xf32>
    %105 = vector.shape_cast %104 : vector<1x4x2048xf32> to vector<4x2048xf32>
    %106 = vector.shape_cast %103 : vector<4x2048xf32> to vector<1x4x2048xf32>
    tpu.vector_store %arg4[%c1_29, %c0_30, %c0_31], %106 {strides = array<i32>} : memref<2x4x2048xf32, #tpu.memory_space<vmem>>, vector<1x4x2048xf32>,
    return
  }
}

</mosaic_0001>

<llo_original>
// kernel: tpu_custom_call.1
$region0: #{tpu_custom_call.1}
  #allocation0 [shape = 'u32[]', space=smem, size = 0x4, offset = 0x4, fixed_abs, tag = 'smem constant byte address 0x4 - core index']
  #allocation1 [shape = 'u32[144,128]{1,0:T(1,128)}', space=vmem, size = 0x12000, scoped, tag = 'internal scratch']
  %s0 = inlined_call_operand.hbm [shape: f32[2,4,2048], index: 0, kind: input, shape index: {}]
  %s1 = inlined_call_operand.vmem [shape: f32[4,4], index: 1, kind: input, shape index: {}]
  %s2 = inlined_call_operand.vmem [shape: f32[4,1], index: 2, kind: input, shape index: {}]
  %s3 = inlined_call_operand.vmem [shape: f32[4,1], index: 3, kind: input, shape index: {}]
  %s4 = inlined_call_operand.hbm [shape: f32[2,4,2048], index: 4, kind: output, shape index: {}]
  %s5 = sld [smem:[#allocation0]]
  $region30: #{tpu_custom_call.1} parent=0
    _
  %s7 = ssub.s32 1, %s5
  %s8 = scalar_select 0, %s7, %s5
  $region1: #{tpu_custom_call.1} parent=0
    #allocation2 [shape = 'u8[65536]{0}', space=vmem, size = 0x10000, scoped, tag = 'input window, operand 0, single buffered']
    #allocation3 [shape = 's32[1]{0}', space=sflag, size = 0x4, scoped, tag = 'scoped memory for tpu_custom_call.1']
    #allocation4 [shape = 's32[1]{0}', space=sflag, size = 0x4, scoped, tag = 'scoped memory for tpu_custom_call.1']
    #allocation5 [shape = 'u8[65536]{0}', space=vmem, size = 0x10000, scoped, tag = 'output window, operand 0, single buffered']
    %9 = vsyncpa [#allocation3], 0
    %10 = vsyncpa [#allocation4], 0
    // Predicated region
    $region2: #{tpu_custom_call.1} parent=1 // pred_check
      _
    $region3: #{tpu_custom_call.1} parent=1 // pred_check_branch
      %12 = sbr.rel (0) target = $region5
    $region4: #{tpu_custom_call.1} parent=1 // pred_region
      %s14 = ssub.s32 2048, 2048
      %15 = vsyncadd [#allocation3], %s14
      %s16 = sshll.u32 [#allocation2], 4
      %s17 = int_to_ptr.vmem [resolvable:$true] %s16
      %22 = dma.hbm_to_vmem [thread:$0]  %s0, 2048, %s17, [#allocation3], 1024, 1024, 64
    $region5: #{tpu_custom_call.1} parent=1 // pred_fallthru
      _
    // Predicated region
    $region6: #{tpu_custom_call.1} parent=1 // pred_check
      _
    $region7: #{tpu_custom_call.1} parent=1 // pred_check_branch
      %24 = sbr.rel (0) target = $region9
    $region8: #{tpu_custom_call.1} parent=1 // pred_region
      _
    $region9: #{tpu_custom_call.1} parent=1 // pred_fallthru
      _
    // Predicated region
    $region10: #{tpu_custom_call.1} parent=1 // pred_check
      _
    $region11: #{tpu_custom_call.1} parent=1 // pred_check_branch
      %26 = sbr.rel (0) target = $region13
    $region12: #{tpu_custom_call.1} parent=1 // pred_region
      _
    $region13: #{tpu_custom_call.1} parent=1 // pred_fallthru
      _
    // Predicated region
    $region14: #{tpu_custom_call.1} parent=1 // pred_check
      _
    $region15: #{tpu_custom_call.1} parent=1 // pred_check_branch
      %28 = sbr.rel (0) target = $region17
    $region16: #{tpu_custom_call.1} parent=1 // pred_region
      _
    $region17: #{tpu_custom_call.1} parent=1 // pred_fallthru
      _
    // Predicated region
    $region18: #{tpu_custom_call.1} parent=1 // pred_check
      _
    $region19: #{tpu_custom_call.1} parent=1 // pred_check_branch
      %30 = sbr.rel (0) target = $region21
    $region20: #{tpu_custom_call.1} parent=1 // pred_region
      %31 = dma.done [#allocation3], 2048
    $region21: #{tpu_custom_call.1} parent=1 // pred_fallthru
      _
    %v32 = vld [vmem:[%s1] sm:$0xf]
    %v33 = vld [vmem:[#allocation2] sm:$0xff]
    %v34 = vld [vmem:[#allocation2 + $0x8] sm:$0xff]
    %v35 = vld [vmem:[#allocation2 + $0x10] sm:$0xff]
    %v36 = vld [vmem:[#allocation2 + $0x18] sm:$0xff]
    %v37 = vld [vmem:[#allocation2 + $0x20] sm:$0xff]
    %v38 = vld [vmem:[#allocation2 + $0x28] sm:$0xff]
    %v39 = vld [vmem:[#allocation2 + $0x30] sm:$0xff]
    %v40 = vld [vmem:[#allocation2 + $0x38] sm:$0xff]
    %42 = vset.pattern.permute.xlu0 0
    %43 = vperm.xlu0 %42, %v32
    %v44 = vpop.permute.xlu0 %43
    %v54 = vlaneseq
    %v55 = vshrl.u32 %v54, 7
    %v56 = vsub.s32 0, %v55
    %v57 = vrot.slane %v33, %v56
    %v58 = vlaneseq
    %v59 = vshrl.u32 %v58, 7
    %v60 = vsub.s32 4, %v59
    %v61 = vrot.slane %v33, %v60
    %v62 = vlaneseq
    %v63 = vshrl.u32 %v62, 7
    %v64 = vsub.s32 0, %v63
    %v65 = vrot.slane %v34, %v64
    %v66 = vlaneseq
    %v67 = vshrl.u32 %v66, 7
    %v68 = vsub.s32 4, %v67
    %v69 = vrot.slane %v34, %v68
    %v70 = vlaneseq
    %v71 = vshrl.u32 %v70, 7
    %v72 = vsub.s32 0, %v71
    %v73 = vrot.slane %v35, %v72
    %v74 = vlaneseq
    %v75 = vshrl.u32 %v74, 7
    %v76 = vsub.s32 4, %v75
    %v77 = vrot.slane %v35, %v76
    %v78 = vlaneseq
    %v79 = vshrl.u32 %v78, 7
    %v80 = vsub.s32 0, %v79
    %v81 = vrot.slane %v36, %v80
    %v82 = vlaneseq
    %v83 = vshrl.u32 %v82, 7
    %v84 = vsub.s32 4, %v83
    %v85 = vrot.slane %v36, %v84
    %v86 = vlaneseq
    %v87 = vshrl.u32 %v86, 7
    %v88 = vsub.s32 0, %v87
    %v89 = vrot.slane %v37, %v88
    %v90 = vlaneseq
    %v91 = vshrl.u32 %v90, 7
    %v92 = vsub.s32 4, %v91
    %v93 = vrot.slane %v37, %v92
    %v94 = vlaneseq
    %v95 = vshrl.u32 %v94, 7
    %v96 = vsub.s32 0, %v95
    %v97 = vrot.slane %v38, %v96
    %v98 = vlaneseq
    %v99 = vshrl.u32 %v98, 7
    %v100 = vsub.s32 4, %v99
    %v101 = vrot.slane %v38, %v100
    %v102 = vlaneseq
    %v103 = vshrl.u32 %v102, 7
    %v104 = vsub.s32 0, %v103
    %v105 = vrot.slane %v39, %v104
    %v106 = vlaneseq
    %v107 = vshrl.u32 %v106, 7
    %v108 = vsub.s32 4, %v107
    %v109 = vrot.slane %v39, %v108
    %v110 = vlaneseq
    %v111 = vshrl.u32 %v110, 7
    %v112 = vsub.s32 0, %v111
    %v113 = vrot.slane %v40, %v112
    %v114 = vlaneseq
    %v115 = vshrl.u32 %v114, 7
    %v116 = vsub.s32 4, %v115
    %v117 = vrot.slane %v40, %v116
    %v134 = vlaneseq
    %v135 = vshrl.u32 %v134, 7
    %v136 = vsub.s32 0, %v135
    %v137 = vrot.slane %v57, %v136
    %v138 = vlaneseq
    %v139 = vshrl.u32 %v138, 7
    %v140 = vsub.s32 0, %v139
    %v141 = vrot.slane %v61, %v140
    %v142 = vlaneseq
    %v143 = vshrl.u32 %v142, 7
    %v144 = vsub.s32 0, %v143
    %v145 = vrot.slane %v65, %v144
    %v146 = vlaneseq
    %v147 = vshrl.u32 %v146, 7
    %v148 = vsub.s32 0, %v147
    %v149 = vrot.slane %v69, %v148
    %v150 = vlaneseq
    %v151 = vshrl.u32 %v150, 7
    %v152 = vsub.s32 0, %v151
    %v153 = vrot.slane %v73, %v152
    %v154 = vlaneseq
    %v155 = vshrl.u32 %v154, 7
    %v156 = vsub.s32 0, %v155
    %v157 = vrot.slane %v77, %v156
    %v158 = vlaneseq
    %v159 = vshrl.u32 %v158, 7
    %v160 = vsub.s32 0, %v159
    %v161 = vrot.slane %v81, %v160
    %v162 = vlaneseq
    %v163 = vshrl.u32 %v162, 7
    %v164 = vsub.s32 0, %v163
    %v165 = vrot.slane %v85, %v164
    %v166 = vlaneseq
    %v167 = vshrl.u32 %v166, 7
    %v168 = vsub.s32 0, %v167
    %v169 = vrot.slane %v89, %v168
    %v170 = vlaneseq
    %v171 = vshrl.u32 %v170, 7
    %v172 = vsub.s32 0, %v171
    %v173 = vrot.slane %v93, %v172
    %v174 = vlaneseq
    %v175 = vshrl.u32 %v174, 7
    %v176 = vsub.s32 0, %v175
    %v177 = vrot.slane %v97, %v176
    %v178 = vlaneseq
    %v179 = vshrl.u32 %v178, 7
    %v180 = vsub.s32 0, %v179
    %v181 = vrot.slane %v101, %v180
    %v182 = vlaneseq
    %v183 = vshrl.u32 %v182, 7
    %v184 = vsub.s32 0, %v183
    %v185 = vrot.slane %v105, %v184
    %v186 = vlaneseq
    %v187 = vshrl.u32 %v186, 7
    %v188 = vsub.s32 0, %v187
    %v189 = vrot.slane %v109, %v188
    %v190 = vlaneseq
    %v191 = vshrl.u32 %v190, 7
    %v192 = vsub.s32 0, %v191
    %v193 = vrot.slane %v113, %v192
    %v194 = vlaneseq
    %v195 = vshrl.u32 %v194, 7
    %v196 = vsub.s32 0, %v195
    %v197 = vrot.slane %v117, %v196
    %v198 = vmul.f32 %v44, %v137
    %v199 = vmul.f32 %v44, %v141
    %v200 = vmul.f32 %v44, %v145
    %v201 = vmul.f32 %v44, %v149
    %v202 = vmul.f32 %v44, %v153
    %v203 = vmul.f32 %v44, %v157
    %v204 = vmul.f32 %v44, %v161
    %v205 = vmul.f32 %v44, %v165
    %v206 = vmul.f32 %v44, %v169
    %v207 = vmul.f32 %v44, %v173
    %v208 = vmul.f32 %v44, %v177
    %v209 = vmul.f32 %v44, %v181
    %v210 = vmul.f32 %v44, %v185
    %v211 = vmul.f32 %v44, %v189
    %v212 = vmul.f32 %v44, %v193
    %v213 = vmul.f32 %v44, %v197
    %214 = vset.pattern.permute.xlu0 1
    %215 = vperm.xlu0 %214, %v32
    %v216 = vpop.permute.xlu0 %215
    %v218 = vlaneseq
    %v219 = vshrl.u32 %v218, 7
    %v220 = vsub.s32 1, %v219
    %v221 = vrot.slane %v33, %v220
    %v222 = vlaneseq
    %v223 = vshrl.u32 %v222, 7
    %v224 = vsub.s32 5, %v223
    %v225 = vrot.slane %v33, %v224
    %v226 = vlaneseq
    %v227 = vshrl.u32 %v226, 7
    %v228 = vsub.s32 1, %v227
    %v229 = vrot.slane %v34, %v228
    %v230 = vlaneseq
    %v231 = vshrl.u32 %v230, 7
    %v232 = vsub.s32 5, %v231
    %v233 = vrot.slane %v34, %v232
    %v234 = vlaneseq
    %v235 = vshrl.u32 %v234, 7
    %v236 = vsub.s32 1, %v235
    %v237 = vrot.slane %v35, %v236
    %v238 = vlaneseq
    %v239 = vshrl.u32 %v238, 7
    %v240 = vsub.s32 5, %v239
    %v241 = vrot.slane %v35, %v240
    %v242 = vlaneseq
    %v243 = vshrl.u32 %v242, 7
    %v244 = vsub.s32 1, %v243
    %v245 = vrot.slane %v36, %v244
    %v246 = vlaneseq
    %v247 = vshrl.u32 %v246, 7
    %v248 = vsub.s32 5, %v247
    %v249 = vrot.slane %v36, %v248
    %v250 = vlaneseq
    %v251 = vshrl.u32 %v250, 7
    %v252 = vsub.s32 1, %v251
    %v253 = vrot.slane %v37, %v252
    %v254 = vlaneseq
    %v255 = vshrl.u32 %v254, 7
    %v256 = vsub.s32 5, %v255
    %v257 = vrot.slane %v37, %v256
    %v258 = vlaneseq
    %v259 = vshrl.u32 %v258, 7
    %v260 = vsub.s32 1, %v259
    %v261 = vrot.slane %v38, %v260
    %v262 = vlaneseq
    %v263 = vshrl.u32 %v262, 7
    %v264 = vsub.s32 5, %v263
    %v265 = vrot.slane %v38, %v264
    %v266 = vlaneseq
    %v267 = vshrl.u32 %v266, 7
    %v268 = vsub.s32 1, %v267
    %v269 = vrot.slane %v39, %v268
    %v270 = vlaneseq
    %v271 = vshrl.u32 %v270, 7
    %v272 = vsub.s32 5, %v271
    %v273 = vrot.slane %v39, %v272
    %v274 = vlaneseq
    %v275 = vshrl.u32 %v274, 7
    %v276 = vsub.s32 1, %v275
    %v277 = vrot.slane %v40, %v276
    %v278 = vlaneseq
    %v279 = vshrl.u32 %v278, 7
    %v280 = vsub.s32 5, %v279
    %v281 = vrot.slane %v40, %v280
    %v298 = vlaneseq
    %v299 = vshrl.u32 %v298, 7
    %v300 = vsub.s32 1, %v299
    %v301 = vrot.slane %v221, %v300
    %v302 = vlaneseq
    %v303 = vshrl.u32 %v302, 7
    %v304 = vsub.s32 1, %v303
    %v305 = vrot.slane %v225, %v304
    %v306 = vlaneseq
    %v307 = vshrl.u32 %v306, 7
    %v308 = vsub.s32 1, %v307
    %v309 = vrot.slane %v229, %v308
    %v310 = vlaneseq
    %v311 = vshrl.u32 %v310, 7
    %v312 = vsub.s32 1, %v311
    %v313 = vrot.slane %v233, %v312
    %v314 = vlaneseq
    %v315 = vshrl.u32 %v314, 7
    %v316 = vsub.s32 1, %v315
    %v317 = vrot.slane %v237, %v316
    %v318 = vlaneseq
    %v319 = vshrl.u32 %v318, 7
    %v320 = vsub.s32 1, %v319
    %v321 = vrot.slane %v241, %v320
    %v322 = vlaneseq
    %v323 = vshrl.u32 %v322, 7
    %v324 = vsub.s32 1, %v323
    %v325 = vrot.slane %v245, %v324
    %v326 = vlaneseq
    %v327 = vshrl.u32 %v326, 7
    %v328 = vsub.s32 1, %v327
    %v329 = vrot.slane %v249, %v328
    %v330 = vlaneseq
    %v331 = vshrl.u32 %v330, 7
    %v332 = vsub.s32 1, %v331
    %v333 = vrot.slane %v253, %v332
    %v334 = vlaneseq
    %v335 = vshrl.u32 %v334, 7
    %v336 = vsub.s32 1, %v335
    %v337 = vrot.slane %v257, %v336
    %v338 = vlaneseq
    %v339 = vshrl.u32 %v338, 7
    %v340 = vsub.s32 1, %v339
    %v341 = vrot.slane %v261, %v340
    %v342 = vlaneseq
    %v343 = vshrl.u32 %v342, 7
    %v344 = vsub.s32 1, %v343
    %v345 = vrot.slane %v265, %v344
    %v346 = vlaneseq
    %v347 = vshrl.u32 %v346, 7
    %v348 = vsub.s32 1, %v347
    %v349 = vrot.slane %v269, %v348
    %v350 = vlaneseq
    %v351 = vshrl.u32 %v350, 7
    %v352 = vsub.s32 1, %v351
    %v353 = vrot.slane %v273, %v352
    %v354 = vlaneseq
    %v355 = vshrl.u32 %v354, 7
    %v356 = vsub.s32 1, %v355
    %v357 = vrot.slane %v277, %v356
    %v358 = vlaneseq
    %v359 = vshrl.u32 %v358, 7
    %v360 = vsub.s32 1, %v359
    %v361 = vrot.slane %v281, %v360
    %v362 = vmul.f32 %v216, %v301
    %v363 = vmul.f32 %v216, %v305
    %v364 = vmul.f32 %v216, %v309
    %v365 = vmul.f32 %v216, %v313
    %v366 = vmul.f32 %v216, %v317
    %v367 = vmul.f32 %v216, %v321
    %v368 = vmul.f32 %v216, %v325
    %v369 = vmul.f32 %v216, %v329
    %v370 = vmul.f32 %v216, %v333
    %v371 = vmul.f32 %v216, %v337
    %v372 = vmul.f32 %v216, %v341
    %v373 = vmul.f32 %v216, %v345
    %v374 = vmul.f32 %v216, %v349
    %v375 = vmul.f32 %v216, %v353
    %v376 = vmul.f32 %v216, %v357
    %v377 = vmul.f32 %v216, %v361
    %v378 = vadd.f32 %v198, %v362
    %v379 = vadd.f32 %v199, %v363
    %v380 = vadd.f32 %v200, %v364
    %v381 = vadd.f32 %v201, %v365
    %v382 = vadd.f32 %v202, %v366
    %v383 = vadd.f32 %v203, %v367
    %v384 = vadd.f32 %v204, %v368
    %v385 = vadd.f32 %v205, %v369
    %v386 = vadd.f32 %v206, %v370
    %v387 = vadd.f32 %v207, %v371
    %v388 = vadd.f32 %v208, %v372
    %v389 = vadd.f32 %v209, %v373
    %v390 = vadd.f32 %v210, %v374
    %v391 = vadd.f32 %v211, %v375
    %v392 = vadd.f32 %v212, %v376
    %v393 = vadd.f32 %v213, %v377
    %394 = vset.pattern.permute.xlu0 2
    %395 = vperm.xlu0 %394, %v32
    %v396 = vpop.permute.xlu0 %395
    %v398 = vlaneseq
    %v399 = vshrl.u32 %v398, 7
    %v400 = vsub.s32 2, %v399
    %v401 = vrot.slane %v33, %v400
    %v402 = vlaneseq
    %v403 = vshrl.u32 %v402, 7
    %v404 = vsub.s32 6, %v403
    %v405 = vrot.slane %v33, %v404
    %v406 = vlaneseq
    %v407 = vshrl.u32 %v406, 7
    %v408 = vsub.s32 2, %v407
    %v409 = vrot.slane %v34, %v408
    %v410 = vlaneseq
    %v411 = vshrl.u32 %v410, 7
    %v412 = vsub.s32 6, %v411
    %v413 = vrot.slane %v34, %v412
    %v414 = vlaneseq
    %v415 = vshrl.u32 %v414, 7
    %v416 = vsub.s32 2, %v415
    %v417 = vrot.slane %v35, %v416
    %v418 = vlaneseq
    %v419 = vshrl.u32 %v418, 7
    %v420 = vsub.s32 6, %v419
    %v421 = vrot.slane %v35, %v420
    %v422 = vlaneseq
    %v423 = vshrl.u32 %v422, 7
    %v424 = vsub.s32 2, %v423
    %v425 = vrot.slane %v36, %v424
    %v426 = vlaneseq
    %v427 = vshrl.u32 %v426, 7
    %v428 = vsub.s32 6, %v427
    %v429 = vrot.slane %v36, %v428
    %v430 = vlaneseq
    %v431 = vshrl.u32 %v430, 7
    %v432 = vsub.s32 2, %v431
    %v433 = vrot.slane %v37, %v432
    %v434 = vlaneseq
    %v435 = vshrl.u32 %v434, 7
    %v436 = vsub.s32 6, %v435
    %v437 = vrot.slane %v37, %v436
    %v438 = vlaneseq
    %v439 = vshrl.u32 %v438, 7
    %v440 = vsub.s32 2, %v439
    %v441 = vrot.slane %v38, %v440
    %v442 = vlaneseq
    %v443 = vshrl.u32 %v442, 7
    %v444 = vsub.s32 6, %v443
    %v445 = vrot.slane %v38, %v444
    %v446 = vlaneseq
    %v447 = vshrl.u32 %v446, 7
    %v448 = vsub.s32 2, %v447
    %v449 = vrot.slane %v39, %v448
    %v450 = vlaneseq
    %v451 = vshrl.u32 %v450, 7
    %v452 = vsub.s32 6, %v451
    %v453 = vrot.slane %v39, %v452
    %v454 = vlaneseq
    %v455 = vshrl.u32 %v454, 7
    %v456 = vsub.s32 2, %v455
    %v457 = vrot.slane %v40, %v456
    %v458 = vlaneseq
    %v459 = vshrl.u32 %v458, 7
    %v460 = vsub.s32 6, %v459
    %v461 = vrot.slane %v40, %v460
    %v478 = vlaneseq
    %v479 = vshrl.u32 %v478, 7
    %v480 = vsub.s32 2, %v479
    %v481 = vrot.slane %v401, %v480
    %v482 = vlaneseq
    %v483 = vshrl.u32 %v482, 7
    %v484 = vsub.s32 2, %v483
    %v485 = vrot.slane %v405, %v484
    %v486 = vlaneseq
    %v487 = vshrl.u32 %v486, 7
    %v488 = vsub.s32 2, %v487
    %v489 = vrot.slane %v409, %v488
    %v490 = vlaneseq
    %v491 = vshrl.u32 %v490, 7
    %v492 = vsub.s32 2, %v491
    %v493 = vrot.slane %v413, %v492
    %v494 = vlaneseq
    %v495 = vshrl.u32 %v494, 7
    %v496 = vsub.s32 2, %v495
    %v497 = vrot.slane %v417, %v496
    %v498 = vlaneseq
    %v499 = vshrl.u32 %v498, 7
    %v500 = vsub.s32 2, %v499
    %v501 = vrot.slane %v421, %v500
    %v502 = vlaneseq
    %v503 = vshrl.u32 %v502, 7
    %v504 = vsub.s32 2, %v503
    %v505 = vrot.slane %v425, %v504
    %v506 = vlaneseq
    %v507 = vshrl.u32 %v506, 7
    %v508 = vsub.s32 2, %v507
    %v509 = vrot.slane %v429, %v508
    %v510 = vlaneseq
    %v511 = vshrl.u32 %v510, 7
    %v512 = vsub.s32 2, %v511
    %v513 = vrot.slane %v433, %v512
    %v514 = vlaneseq
    %v515 = vshrl.u32 %v514, 7
    %v516 = vsub.s32 2, %v515
    %v517 = vrot.slane %v437, %v516
    %v518 = vlaneseq
    %v519 = vshrl.u32 %v518, 7
    %v520 = vsub.s32 2, %v519
    %v521 = vrot.slane %v441, %v520
    %v522 = vlaneseq
    %v523 = vshrl.u32 %v522, 7
    %v524 = vsub.s32 2, %v523
    %v525 = vrot.slane %v445, %v524
    %v526 = vlaneseq
    %v527 = vshrl.u32 %v526, 7
    %v528 = vsub.s32 2, %v527
    %v529 = vrot.slane %v449, %v528
    %v530 = vlaneseq
    %v531 = vshrl.u32 %v530, 7
    %v532 = vsub.s32 2, %v531
    %v533 = vrot.slane %v453, %v532
    %v534 = vlaneseq
    %v535 = vshrl.u32 %v534, 7
    %v536 = vsub.s32 2, %v535
    %v537 = vrot.slane %v457, %v536
    %v538 = vlaneseq
    %v539 = vshrl.u32 %v538, 7
    %v540 = vsub.s32 2, %v539
    %v541 = vrot.slane %v461, %v540
    %v542 = vmul.f32 %v396, %v481
    %v543 = vmul.f32 %v396, %v485
    %v544 = vmul.f32 %v396, %v489
    %v545 = vmul.f32 %v396, %v493
    %v546 = vmul.f32 %v396, %v497
    %v547 = vmul.f32 %v396, %v501
    %v548 = vmul.f32 %v396, %v505
    %v549 = vmul.f32 %v396, %v509
    %v550 = vmul.f32 %v396, %v513
    %v551 = vmul.f32 %v396, %v517
    %v552 = vmul.f32 %v396, %v521
    %v553 = vmul.f32 %v396, %v525
    %v554 = vmul.f32 %v396, %v529
    %v555 = vmul.f32 %v396, %v533
    %v556 = vmul.f32 %v396, %v537
    %v557 = vmul.f32 %v396, %v541
    %v558 = vadd.f32 %v378, %v542
    %v559 = vadd.f32 %v379, %v543
    %v560 = vadd.f32 %v380, %v544
    %v561 = vadd.f32 %v381, %v545
    %v562 = vadd.f32 %v382, %v546
    %v563 = vadd.f32 %v383, %v547
    %v564 = vadd.f32 %v384, %v548
    %v565 = vadd.f32 %v385, %v549
    %v566 = vadd.f32 %v386, %v550
    %v567 = vadd.f32 %v387, %v551
    %v568 = vadd.f32 %v388, %v552
    %v569 = vadd.f32 %v389, %v553
    %v570 = vadd.f32 %v390, %v554
    %v571 = vadd.f32 %v391, %v555
    %v572 = vadd.f32 %v392, %v556
    %v573 = vadd.f32 %v393, %v557
    %574 = vset.pattern.permute.xlu0 3
    %575 = vperm.xlu0 %574, %v32
    %v576 = vpop.permute.xlu0 %575
    %v578 = vlaneseq
    %v579 = vshrl.u32 %v578, 7
    %v580 = vsub.s32 3, %v579
    %v581 = vrot.slane %v33, %v580
    %v582 = vlaneseq
    %v583 = vshrl.u32 %v582, 7
    %v584 = vsub.s32 7, %v583
    %v585 = vrot.slane %v33, %v584
    %v586 = vlaneseq
    %v587 = vshrl.u32 %v586, 7
    %v588 = vsub.s32 3, %v587
    %v589 = vrot.slane %v34, %v588
    %v590 = vlaneseq
    %v591 = vshrl.u32 %v590, 7
    %v592 = vsub.s32 7, %v591
    %v593 = vrot.slane %v34, %v592
    %v594 = vlaneseq
    %v595 = vshrl.u32 %v594, 7
    %v596 = vsub.s32 3, %v595
    %v597 = vrot.slane %v35, %v596
    %v598 = vlaneseq
    %v599 = vshrl.u32 %v598, 7
    %v600 = vsub.s32 7, %v599
    %v601 = vrot.slane %v35, %v600
    %v602 = vlaneseq
    %v603 = vshrl.u32 %v602, 7
    %v604 = vsub.s32 3, %v603
    %v605 = vrot.slane %v36, %v604
    %v606 = vlaneseq
    %v607 = vshrl.u32 %v606, 7
    %v608 = vsub.s32 7, %v607
    %v609 = vrot.slane %v36, %v608
    %v610 = vlaneseq
    %v611 = vshrl.u32 %v610, 7
    %v612 = vsub.s32 3, %v611
    %v613 = vrot.slane %v37, %v612
    %v614 = vlaneseq
    %v615 = vshrl.u32 %v614, 7
    %v616 = vsub.s32 7, %v615
    %v617 = vrot.slane %v37, %v616
    %v618 = vlaneseq
    %v619 = vshrl.u32 %v618, 7
    %v620 = vsub.s32 3, %v619
    %v621 = vrot.slane %v38, %v620
    %v622 = vlaneseq
    %v623 = vshrl.u32 %v622, 7
    %v624 = vsub.s32 7, %v623
    %v625 = vrot.slane %v38, %v624
    %v626 = vlaneseq
    %v627 = vshrl.u32 %v626, 7
    %v628 = vsub.s32 3, %v627
    %v629 = vrot.slane %v39, %v628
    %v630 = vlaneseq
    %v631 = vshrl.u32 %v630, 7
    %v632 = vsub.s32 7, %v631
    %v633 = vrot.slane %v39, %v632
    %v634 = vlaneseq
    %v635 = vshrl.u32 %v634, 7
    %v636 = vsub.s32 3, %v635
    %v637 = vrot.slane %v40, %v636
    %v638 = vlaneseq
    %v639 = vshrl.u32 %v638, 7
    %v640 = vsub.s32 7, %v639
    %v641 = vrot.slane %v40, %v640
    %v658 = vlaneseq
    %v659 = vshrl.u32 %v658, 7
    %v660 = vsub.s32 3, %v659
    %v661 = vrot.slane %v581, %v660
    %v662 = vlaneseq
    %v663 = vshrl.u32 %v662, 7
    %v664 = vsub.s32 3, %v663
    %v665 = vrot.slane %v585, %v664
    %v666 = vlaneseq
    %v667 = vshrl.u32 %v666, 7
    %v668 = vsub.s32 3, %v667
    %v669 = vrot.slane %v589, %v668
    %v670 = vlaneseq
    %v671 = vshrl.u32 %v670, 7
    %v672 = vsub.s32 3, %v671
    %v673 = vrot.slane %v593, %v672
    %v674 = vlaneseq
    %v675 = vshrl.u32 %v674, 7
    %v676 = vsub.s32 3, %v675
    %v677 = vrot.slane %v597, %v676
    %v678 = vlaneseq
    %v679 = vshrl.u32 %v678, 7
    %v680 = vsub.s32 3, %v679
    %v681 = vrot.slane %v601, %v680
    %v682 = vlaneseq
    %v683 = vshrl.u32 %v682, 7
    %v684 = vsub.s32 3, %v683
    %v685 = vrot.slane %v605, %v684
    %v686 = vlaneseq
    %v687 = vshrl.u32 %v686, 7
    %v688 = vsub.s32 3, %v687
    %v689 = vrot.slane %v609, %v688
    %v690 = vlaneseq
    %v691 = vshrl.u32 %v690, 7
    %v692 = vsub.s32 3, %v691
    %v693 = vrot.slane %v613, %v692
    %v694 = vlaneseq
    %v695 = vshrl.u32 %v694, 7
    %v696 = vsub.s32 3, %v695
    %v697 = vrot.slane %v617, %v696
    %v698 = vlaneseq
    %v699 = vshrl.u32 %v698, 7
    %v700 = vsub.s32 3, %v699
    %v701 = vrot.slane %v621, %v700
    %v702 = vlaneseq
    %v703 = vshrl.u32 %v702, 7
    %v704 = vsub.s32 3, %v703
    %v705 = vrot.slane %v625, %v704
    %v706 = vlaneseq
    %v707 = vshrl.u32 %v706, 7
    %v708 = vsub.s32 3, %v707
    %v709 = vrot.slane %v629, %v708
    %v710 = vlaneseq
    %v711 = vshrl.u32 %v710, 7
    %v712 = vsub.s32 3, %v711
    %v713 = vrot.slane %v633, %v712
    %v714 = vlaneseq
    %v715 = vshrl.u32 %v714, 7
    %v716 = vsub.s32 3, %v715
    %v717 = vrot.slane %v637, %v716
    %v718 = vlaneseq
    %v719 = vshrl.u32 %v718, 7
    %v720 = vsub.s32 3, %v719
    %v721 = vrot.slane %v641, %v720
    %v722 = vmul.f32 %v576, %v661
    %v723 = vmul.f32 %v576, %v665
    %v724 = vmul.f32 %v576, %v669
    %v725 = vmul.f32 %v576, %v673
    %v726 = vmul.f32 %v576, %v677
    %v727 = vmul.f32 %v576, %v681
    %v728 = vmul.f32 %v576, %v685
    %v729 = vmul.f32 %v576, %v689
    %v730 = vmul.f32 %v576, %v693
    %v731 = vmul.f32 %v576, %v697
    %v732 = vmul.f32 %v576, %v701
    %v733 = vmul.f32 %v576, %v705
    %v734 = vmul.f32 %v576, %v709
    %v735 = vmul.f32 %v576, %v713
    %v736 = vmul.f32 %v576, %v717
    %v737 = vmul.f32 %v576, %v721
    %v738 = vadd.f32 %v558, %v722
    %v739 = vadd.f32 %v559, %v723
    %v740 = vadd.f32 %v560, %v724
    %v741 = vadd.f32 %v561, %v725
    %v742 = vadd.f32 %v562, %v726
    %v743 = vadd.f32 %v563, %v727
    %v744 = vadd.f32 %v564, %v728
    %v745 = vadd.f32 %v565, %v729
    %v746 = vadd.f32 %v566, %v730
    %v747 = vadd.f32 %v567, %v731
    %v748 = vadd.f32 %v568, %v732
    %v749 = vadd.f32 %v569, %v733
    %v750 = vadd.f32 %v570, %v734
    %v751 = vadd.f32 %v571, %v735
    %v752 = vadd.f32 %v572, %v736
    %v753 = vadd.f32 %v573, %v737
    %vm754 = vcmask 1043456
    %v755 = vsel %vm754, %v738, 0.0
    %v756 = vsel %vm754, %v739, 0.0
    %v757 = vadd.f32 %v755, %v756
    %v758 = vsel %vm754, %v740, 0.0
    %v759 = vadd.f32 %v757, %v758
    %v760 = vsel %vm754, %v741, 0.0
    %v761 = vadd.f32 %v759, %v760
    %v762 = vsel %vm754, %v742, 0.0
    %v763 = vadd.f32 %v761, %v762
    %v764 = vsel %vm754, %v743, 0.0
    %v765 = vadd.f32 %v763, %v764
    %v766 = vsel %vm754, %v744, 0.0
    %v767 = vadd.f32 %v765, %v766
    %v768 = vsel %vm754, %v745, 0.0
    %v769 = vadd.f32 %v767, %v768
    %v770 = vsel %vm754, %v746, 0.0
    %v771 = vadd.f32 %v769, %v770
    %v772 = vsel %vm754, %v747, 0.0
    %v773 = vadd.f32 %v771, %v772
    %v774 = vsel %vm754, %v748, 0.0
    %v775 = vadd.f32 %v773, %v774
    %v776 = vsel %vm754, %v749, 0.0
    %v777 = vadd.f32 %v775, %v776
    %v778 = vsel %vm754, %v750, 0.0
    %v779 = vadd.f32 %v777, %v778
    %v780 = vsel %vm754, %v751, 0.0
    %v781 = vadd.f32 %v779, %v780
    %v782 = vsel %vm754, %v752, 0.0
    %v783 = vadd.f32 %v781, %v782
    %v784 = vsel %vm754, %v753, 0.0
    %v785 = vadd.f32 %v783, %v784
    %786 = vadd.xlane.f32.xlu0 %v785
    %v787 = vpop.xlane.xlu0 %786
    %v788 = vadd.f32 %v787, 0.0
    %s789 = scalar_lea.vmem [#allocation2], 64
    %v790 = vld [vmem:[%s789] sm:$0xff]
    %v791 = vld [vmem:[%s789 + $0x8] sm:$0xff]
    %v792 = vld [vmem:[%s789 + $0x10] sm:$0xff]
    %v793 = vld [vmem:[%s789 + $0x18] sm:$0xff]
    %v794 = vld [vmem:[%s789 + $0x20] sm:$0xff]
    %v795 = vld [vmem:[%s789 + $0x28] sm:$0xff]
    %v796 = vld [vmem:[%s789 + $0x30] sm:$0xff]
    %v797 = vld [vmem:[%s789 + $0x38] sm:$0xff]
    %v806 = vlaneseq
    %v807 = vshrl.u32 %v806, 7
    %v808 = vsub.s32 0, %v807
    %v809 = vrot.slane %v790, %v808
    %v810 = vlaneseq
    %v811 = vshrl.u32 %v810, 7
    %v812 = vsub.s32 4, %v811
    %v813 = vrot.slane %v790, %v812
    %v814 = vlaneseq
    %v815 = vshrl.u32 %v814, 7
    %v816 = vsub.s32 0, %v815
    %v817 = vrot.slane %v791, %v816
    %v818 = vlaneseq
    %v819 = vshrl.u32 %v818, 7
    %v820 = vsub.s32 4, %v819
    %v821 = vrot.slane %v791, %v820
    %v822 = vlaneseq
    %v823 = vshrl.u32 %v822, 7
    %v824 = vsub.s32 0, %v823
    %v825 = vrot.slane %v792, %v824
    %v826 = vlaneseq
    %v827 = vshrl.u32 %v826, 7
    %v828 = vsub.s32 4, %v827
    %v829 = vrot.slane %v792, %v828
    %v830 = vlaneseq
    %v831 = vshrl.u32 %v830, 7
    %v832 = vsub.s32 0, %v831
    %v833 = vrot.slane %v793, %v832
    %v834 = vlaneseq
    %v835 = vshrl.u32 %v834, 7
    %v836 = vsub.s32 4, %v835
    %v837 = vrot.slane %v793, %v836
    %v838 = vlaneseq
    %v839 = vshrl.u32 %v838, 7
    %v840 = vsub.s32 0, %v839
    %v841 = vrot.slane %v794, %v840
    %v842 = vlaneseq
    %v843 = vshrl.u32 %v842, 7
    %v844 = vsub.s32 4, %v843
    %v845 = vrot.slane %v794, %v844
    %v846 = vlaneseq
    %v847 = vshrl.u32 %v846, 7
    %v848 = vsub.s32 0, %v847
    %v849 = vrot.slane %v795, %v848
    %v850 = vlaneseq
    %v851 = vshrl.u32 %v850, 7
    %v852 = vsub.s32 4, %v851
    %v853 = vrot.slane %v795, %v852
    %v854 = vlaneseq
    %v855 = vshrl.u32 %v854, 7
    %v856 = vsub.s32 0, %v855
    %v857 = vrot.slane %v796, %v856
    %v858 = vlaneseq
    %v859 = vshrl.u32 %v858, 7
    %v860 = vsub.s32 4, %v859
    %v861 = vrot.slane %v796, %v860
    %v862 = vlaneseq
    %v863 = vshrl.u32 %v862, 7
    %v864 = vsub.s32 0, %v863
    %v865 = vrot.slane %v797, %v864
    %v866 = vlaneseq
    %v867 = vshrl.u32 %v866, 7
    %v868 = vsub.s32 4, %v867
    %v869 = vrot.slane %v797, %v868
    %v886 = vlaneseq
    %v887 = vshrl.u32 %v886, 7
    %v888 = vsub.s32 0, %v887
    %v889 = vrot.slane %v809, %v888
    %v890 = vlaneseq
    %v891 = vshrl.u32 %v890, 7
    %v892 = vsub.s32 0, %v891
    %v893 = vrot.slane %v813, %v892
    %v894 = vlaneseq
    %v895 = vshrl.u32 %v894, 7
    %v896 = vsub.s32 0, %v895
    %v897 = vrot.slane %v817, %v896
    %v898 = vlaneseq
    %v899 = vshrl.u32 %v898, 7
    %v900 = vsub.s32 0, %v899
    %v901 = vrot.slane %v821, %v900
    %v902 = vlaneseq
    %v903 = vshrl.u32 %v902, 7
    %v904 = vsub.s32 0, %v903
    %v905 = vrot.slane %v825, %v904
    %v906 = vlaneseq
    %v907 = vshrl.u32 %v906, 7
    %v908 = vsub.s32 0, %v907
    %v909 = vrot.slane %v829, %v908
    %v910 = vlaneseq
    %v911 = vshrl.u32 %v910, 7
    %v912 = vsub.s32 0, %v911
    %v913 = vrot.slane %v833, %v912
    %v914 = vlaneseq
    %v915 = vshrl.u32 %v914, 7
    %v916 = vsub.s32 0, %v915
    %v917 = vrot.slane %v837, %v916
    %v918 = vlaneseq
    %v919 = vshrl.u32 %v918, 7
    %v920 = vsub.s32 0, %v919
    %v921 = vrot.slane %v841, %v920
    %v922 = vlaneseq
    %v923 = vshrl.u32 %v922, 7
    %v924 = vsub.s32 0, %v923
    %v925 = vrot.slane %v845, %v924
    %v926 = vlaneseq
    %v927 = vshrl.u32 %v926, 7
    %v928 = vsub.s32 0, %v927
    %v929 = vrot.slane %v849, %v928
    %v930 = vlaneseq
    %v931 = vshrl.u32 %v930, 7
    %v932 = vsub.s32 0, %v931
    %v933 = vrot.slane %v853, %v932
    %v934 = vlaneseq
    %v935 = vshrl.u32 %v934, 7
    %v936 = vsub.s32 0, %v935
    %v937 = vrot.slane %v857, %v936
    %v938 = vlaneseq
    %v939 = vshrl.u32 %v938, 7
    %v940 = vsub.s32 0, %v939
    %v941 = vrot.slane %v861, %v940
    %v942 = vlaneseq
    %v943 = vshrl.u32 %v942, 7
    %v944 = vsub.s32 0, %v943
    %v945 = vrot.slane %v865, %v944
    %v946 = vlaneseq
    %v947 = vshrl.u32 %v946, 7
    %v948 = vsub.s32 0, %v947
    %v949 = vrot.slane %v869, %v948
    %v950 = vmul.f32 %v44, %v889
    %v951 = vmul.f32 %v44, %v893
    %v952 = vmul.f32 %v44, %v897
    %v953 = vmul.f32 %v44, %v901
    %v954 = vmul.f32 %v44, %v905
    %v955 = vmul.f32 %v44, %v909
    %v956 = vmul.f32 %v44, %v913
    %v957 = vmul.f32 %v44, %v917
    %v958 = vmul.f32 %v44, %v921
    %v959 = vmul.f32 %v44, %v925
    %v960 = vmul.f32 %v44, %v929
    %v961 = vmul.f32 %v44, %v933
    %v962 = vmul.f32 %v44, %v937
    %v963 = vmul.f32 %v44, %v941
    %v964 = vmul.f32 %v44, %v945
    %v965 = vmul.f32 %v44, %v949
    %v966 = vlaneseq
    %v967 = vshrl.u32 %v966, 7
    %v968 = vsub.s32 1, %v967
    %v969 = vrot.slane %v790, %v968
    %v970 = vlaneseq
    %v971 = vshrl.u32 %v970, 7
    %v972 = vsub.s32 5, %v971
    %v973 = vrot.slane %v790, %v972
    %v974 = vlaneseq
    %v975 = vshrl.u32 %v974, 7
    %v976 = vsub.s32 1, %v975
    %v977 = vrot.slane %v791, %v976
    %v978 = vlaneseq
    %v979 = vshrl.u32 %v978, 7
    %v980 = vsub.s32 5, %v979
    %v981 = vrot.slane %v791, %v980
    %v982 = vlaneseq
    %v983 = vshrl.u32 %v982, 7
    %v984 = vsub.s32 1, %v983
    %v985 = vrot.slane %v792, %v984
    %v986 = vlaneseq
    %v987 = vshrl.u32 %v986, 7
    %v988 = vsub.s32 5, %v987
    %v989 = vrot.slane %v792, %v988
    %v990 = vlaneseq
    %v991 = vshrl.u32 %v990, 7
    %v992 = vsub.s32 1, %v991
    %v993 = vrot.slane %v793, %v992
    %v994 = vlaneseq
    %v995 = vshrl.u32 %v994, 7
    %v996 = vsub.s32 5, %v995
    %v997 = vrot.slane %v793, %v996
    %v998 = vlaneseq
    %v999 = vshrl.u32 %v998, 7
    %v1000 = vsub.s32 1, %v999
    %v1001 = vrot.slane %v794, %v1000
    %v1002 = vlaneseq
    %v1003 = vshrl.u32 %v1002, 7
    %v1004 = vsub.s32 5, %v1003
    %v1005 = vrot.slane %v794, %v1004
    %v1006 = vlaneseq
    %v1007 = vshrl.u32 %v1006, 7
    %v1008 = vsub.s32 1, %v1007
    %v1009 = vrot.slane %v795, %v1008
    %v1010 = vlaneseq
    %v1011 = vshrl.u32 %v1010, 7
    %v1012 = vsub.s32 5, %v1011
    %v1013 = vrot.slane %v795, %v1012
    %v1014 = vlaneseq
    %v1015 = vshrl.u32 %v1014, 7
    %v1016 = vsub.s32 1, %v1015
    %v1017 = vrot.slane %v796, %v1016
    %v1018 = vlaneseq
    %v1019 = vshrl.u32 %v1018, 7
    %v1020 = vsub.s32 5, %v1019
    %v1021 = vrot.slane %v796, %v1020
    %v1022 = vlaneseq
    %v1023 = vshrl.u32 %v1022, 7
    %v1024 = vsub.s32 1, %v1023
    %v1025 = vrot.slane %v797, %v1024
    %v1026 = vlaneseq
    %v1027 = vshrl.u32 %v1026, 7
    %v1028 = vsub.s32 5, %v1027
    %v1029 = vrot.slane %v797, %v1028
    %v1046 = vlaneseq
    %v1047 = vshrl.u32 %v1046, 7
    %v1048 = vsub.s32 1, %v1047
    %v1049 = vrot.slane %v969, %v1048
    %v1050 = vlaneseq
    %v1051 = vshrl.u32 %v1050, 7
    %v1052 = vsub.s32 1, %v1051
    %v1053 = vrot.slane %v973, %v1052
    %v1054 = vlaneseq
    %v1055 = vshrl.u32 %v1054, 7
    %v1056 = vsub.s32 1, %v1055
    %v1057 = vrot.slane %v977, %v1056
    %v1058 = vlaneseq
    %v1059 = vshrl.u32 %v1058, 7
    %v1060 = vsub.s32 1, %v1059
    %v1061 = vrot.slane %v981, %v1060
    %v1062 = vlaneseq
    %v1063 = vshrl.u32 %v1062, 7
    %v1064 = vsub.s32 1, %v1063
    %v1065 = vrot.slane %v985, %v1064
    %v1066 = vlaneseq
    %v1067 = vshrl.u32 %v1066, 7
    %v1068 = vsub.s32 1, %v1067
    %v1069 = vrot.slane %v989, %v1068
    %v1070 = vlaneseq
    %v1071 = vshrl.u32 %v1070, 7
    %v1072 = vsub.s32 1, %v1071
    %v1073 = vrot.slane %v993, %v1072
    %v1074 = vlaneseq
    %v1075 = vshrl.u32 %v1074, 7
    %v1076 = vsub.s32 1, %v1075
    %v1077 = vrot.slane %v997, %v1076
    %v1078 = vlaneseq
    %v1079 = vshrl.u32 %v1078, 7
    %v1080 = vsub.s32 1, %v1079
    %v1081 = vrot.slane %v1001, %v1080
    %v1082 = vlaneseq
    %v1083 = vshrl.u32 %v1082, 7
    %v1084 = vsub.s32 1, %v1083
    %v1085 = vrot.slane %v1005, %v1084
    %v1086 = vlaneseq
    %v1087 = vshrl.u32 %v1086, 7
    %v1088 = vsub.s32 1, %v1087
    %v1089 = vrot.slane %v1009, %v1088
    %v1090 = vlaneseq
    %v1091 = vshrl.u32 %v1090, 7
    %v1092 = vsub.s32 1, %v1091
    %v1093 = vrot.slane %v1013, %v1092
    %v1094 = vlaneseq
    %v1095 = vshrl.u32 %v1094, 7
    %v1096 = vsub.s32 1, %v1095
    %v1097 = vrot.slane %v1017, %v1096
    %v1098 = vlaneseq
    %v1099 = vshrl.u32 %v1098, 7
    %v1100 = vsub.s32 1, %v1099
    %v1101 = vrot.slane %v1021, %v1100
    %v1102 = vlaneseq
    %v1103 = vshrl.u32 %v1102, 7
    %v1104 = vsub.s32 1, %v1103
    %v1105 = vrot.slane %v1025, %v1104
    %v1106 = vlaneseq
    %v1107 = vshrl.u32 %v1106, 7
    %v1108 = vsub.s32 1, %v1107
    %v1109 = vrot.slane %v1029, %v1108
    %v1110 = vmul.f32 %v216, %v1049
    %v1111 = vmul.f32 %v216, %v1053
    %v1112 = vmul.f32 %v216, %v1057
    %v1113 = vmul.f32 %v216, %v1061
    %v1114 = vmul.f32 %v216, %v1065
    %v1115 = vmul.f32 %v216, %v1069
    %v1116 = vmul.f32 %v216, %v1073
    %v1117 = vmul.f32 %v216, %v1077
    %v1118 = vmul.f32 %v216, %v1081
    %v1119 = vmul.f32 %v216, %v1085
    %v1120 = vmul.f32 %v216, %v1089
    %v1121 = vmul.f32 %v216, %v1093
    %v1122 = vmul.f32 %v216, %v1097
    %v1123 = vmul.f32 %v216, %v1101
    %v1124 = vmul.f32 %v216, %v1105
    %v1125 = vmul.f32 %v216, %v1109
    %v1126 = vadd.f32 %v950, %v1110
    %v1127 = vadd.f32 %v951, %v1111
    %v1128 = vadd.f32 %v952, %v1112
    %v1129 = vadd.f32 %v953, %v1113
    %v1130 = vadd.f32 %v954, %v1114
    %v1131 = vadd.f32 %v955, %v1115
    %v1132 = vadd.f32 %v956, %v1116
    %v1133 = vadd.f32 %v957, %v1117
    %v1134 = vadd.f32 %v958, %v1118
    %v1135 = vadd.f32 %v959, %v1119
    %v1136 = vadd.f32 %v960, %v1120
    %v1137 = vadd.f32 %v961, %v1121
    %v1138 = vadd.f32 %v962, %v1122
    %v1139 = vadd.f32 %v963, %v1123
    %v1140 = vadd.f32 %v964, %v1124
    %v1141 = vadd.f32 %v965, %v1125
    %v1142 = vlaneseq
    %v1143 = vshrl.u32 %v1142, 7
    %v1144 = vsub.s32 2, %v1143
    %v1145 = vrot.slane %v790, %v1144
    %v1146 = vlaneseq
    %v1147 = vshrl.u32 %v1146, 7
    %v1148 = vsub.s32 6, %v1147
    %v1149 = vrot.slane %v790, %v1148
    %v1150 = vlaneseq
    %v1151 = vshrl.u32 %v1150, 7
    %v1152 = vsub.s32 2, %v1151
    %v1153 = vrot.slane %v791, %v1152
    %v1154 = vlaneseq
    %v1155 = vshrl.u32 %v1154, 7
    %v1156 = vsub.s32 6, %v1155
    %v1157 = vrot.slane %v791, %v1156
    %v1158 = vlaneseq
    %v1159 = vshrl.u32 %v1158, 7
    %v1160 = vsub.s32 2, %v1159
    %v1161 = vrot.slane %v792, %v1160
    %v1162 = vlaneseq
    %v1163 = vshrl.u32 %v1162, 7
    %v1164 = vsub.s32 6, %v1163
    %v1165 = vrot.slane %v792, %v1164
    %v1166 = vlaneseq
    %v1167 = vshrl.u32 %v1166, 7
    %v1168 = vsub.s32 2, %v1167
    %v1169 = vrot.slane %v793, %v1168
    %v1170 = vlaneseq
    %v1171 = vshrl.u32 %v1170, 7
    %v1172 = vsub.s32 6, %v1171
    %v1173 = vrot.slane %v793, %v1172
    %v1174 = vlaneseq
    %v1175 = vshrl.u32 %v1174, 7
    %v1176 = vsub.s32 2, %v1175
    %v1177 = vrot.slane %v794, %v1176
    %v1178 = vlaneseq
    %v1179 = vshrl.u32 %v1178, 7
    %v1180 = vsub.s32 6, %v1179
    %v1181 = vrot.slane %v794, %v1180
    %v1182 = vlaneseq
    %v1183 = vshrl.u32 %v1182, 7
    %v1184 = vsub.s32 2, %v1183
    %v1185 = vrot.slane %v795, %v1184
    %v1186 = vlaneseq
    %v1187 = vshrl.u32 %v1186, 7
    %v1188 = vsub.s32 6, %v1187
    %v1189 = vrot.slane %v795, %v1188
    %v1190 = vlaneseq
    %v1191 = vshrl.u32 %v1190, 7
    %v1192 = vsub.s32 2, %v1191
    %v1193 = vrot.slane %v796, %v1192
    %v1194 = vlaneseq
    %v1195 = vshrl.u32 %v1194, 7
    %v1196 = vsub.s32 6, %v1195
    %v1197 = vrot.slane %v796, %v1196
    %v1198 = vlaneseq
    %v1199 = vshrl.u32 %v1198, 7
    %v1200 = vsub.s32 2, %v1199
    %v1201 = vrot.slane %v797, %v1200
    %v1202 = vlaneseq
    %v1203 = vshrl.u32 %v1202, 7
    %v1204 = vsub.s32 6, %v1203
    %v1205 = vrot.slane %v797, %v1204
    %v1222 = vlaneseq
    %v1223 = vshrl.u32 %v1222, 7
    %v1224 = vsub.s32 2, %v1223
    %v1225 = vrot.slane %v1145, %v1224
    %v1226 = vlaneseq
    %v1227 = vshrl.u32 %v1226, 7
    %v1228 = vsub.s32 2, %v1227
    %v1229 = vrot.slane %v1149, %v1228
    %v1230 = vlaneseq
    %v1231 = vshrl.u32 %v1230, 7
    %v1232 = vsub.s32 2, %v1231
    %v1233 = vrot.slane %v1153, %v1232
    %v1234 = vlaneseq
    %v1235 = vshrl.u32 %v1234, 7
    %v1236 = vsub.s32 2, %v1235
    %v1237 = vrot.slane %v1157, %v1236
    %v1238 = vlaneseq
    %v1239 = vshrl.u32 %v1238, 7
    %v1240 = vsub.s32 2, %v1239
    %v1241 = vrot.slane %v1161, %v1240
    %v1242 = vlaneseq
    %v1243 = vshrl.u32 %v1242, 7
    %v1244 = vsub.s32 2, %v1243
    %v1245 = vrot.slane %v1165, %v1244
    %v1246 = vlaneseq
    %v1247 = vshrl.u32 %v1246, 7
    %v1248 = vsub.s32 2, %v1247
    %v1249 = vrot.slane %v1169, %v1248
    %v1250 = vlaneseq
    %v1251 = vshrl.u32 %v1250, 7
    %v1252 = vsub.s32 2, %v1251
    %v1253 = vrot.slane %v1173, %v1252
    %v1254 = vlaneseq
    %v1255 = vshrl.u32 %v1254, 7
    %v1256 = vsub.s32 2, %v1255
    %v1257 = vrot.slane %v1177, %v1256
    %v1258 = vlaneseq
    %v1259 = vshrl.u32 %v1258, 7
    %v1260 = vsub.s32 2, %v1259
    %v1261 = vrot.slane %v1181, %v1260
    %v1262 = vlaneseq
    %v1263 = vshrl.u32 %v1262, 7
    %v1264 = vsub.s32 2, %v1263
    %v1265 = vrot.slane %v1185, %v1264
    %v1266 = vlaneseq
    %v1267 = vshrl.u32 %v1266, 7
    %v1268 = vsub.s32 2, %v1267
    %v1269 = vrot.slane %v1189, %v1268
    %v1270 = vlaneseq
    %v1271 = vshrl.u32 %v1270, 7
    %v1272 = vsub.s32 2, %v1271
    %v1273 = vrot.slane %v1193, %v1272
    %v1274 = vlaneseq
    %v1275 = vshrl.u32 %v1274, 7
    %v1276 = vsub.s32 2, %v1275
    %v1277 = vrot.slane %v1197, %v1276
    %v1278 = vlaneseq
    %v1279 = vshrl.u32 %v1278, 7
    %v1280 = vsub.s32 2, %v1279
    %v1281 = vrot.slane %v1201, %v1280
    %v1282 = vlaneseq
    %v1283 = vshrl.u32 %v1282, 7
    %v1284 = vsub.s32 2, %v1283
    %v1285 = vrot.slane %v1205, %v1284
    %v1286 = vmul.f32 %v396, %v1225
    %v1287 = vmul.f32 %v396, %v1229
    %v1288 = vmul.f32 %v396, %v1233
    %v1289 = vmul.f32 %v396, %v1237
    %v1290 = vmul.f32 %v396, %v1241
    %v1291 = vmul.f32 %v396, %v1245
    %v1292 = vmul.f32 %v396, %v1249
    %v1293 = vmul.f32 %v396, %v1253
    %v1294 = vmul.f32 %v396, %v1257
    %v1295 = vmul.f32 %v396, %v1261
    %v1296 = vmul.f32 %v396, %v1265
    %v1297 = vmul.f32 %v396, %v1269
    %v1298 = vmul.f32 %v396, %v1273
    %v1299 = vmul.f32 %v396, %v1277
    %v1300 = vmul.f32 %v396, %v1281
    %v1301 = vmul.f32 %v396, %v1285
    %v1302 = vadd.f32 %v1126, %v1286
    %v1303 = vadd.f32 %v1127, %v1287
    %v1304 = vadd.f32 %v1128, %v1288
    %v1305 = vadd.f32 %v1129, %v1289
    %v1306 = vadd.f32 %v1130, %v1290
    %v1307 = vadd.f32 %v1131, %v1291
    %v1308 = vadd.f32 %v1132, %v1292
    %v1309 = vadd.f32 %v1133, %v1293
    %v1310 = vadd.f32 %v1134, %v1294
    %v1311 = vadd.f32 %v1135, %v1295
    %v1312 = vadd.f32 %v1136, %v1296
    %v1313 = vadd.f32 %v1137, %v1297
    %v1314 = vadd.f32 %v1138, %v1298
    %v1315 = vadd.f32 %v1139, %v1299
    %v1316 = vadd.f32 %v1140, %v1300
    %v1317 = vadd.f32 %v1141, %v1301
    %v1318 = vlaneseq
    %v1319 = vshrl.u32 %v1318, 7
    %v1320 = vsub.s32 3, %v1319
    %v1321 = vrot.slane %v790, %v1320
    %v1322 = vlaneseq
    %v1323 = vshrl.u32 %v1322, 7
    %v1324 = vsub.s32 7, %v1323
    %v1325 = vrot.slane %v790, %v1324
    %v1326 = vlaneseq
    %v1327 = vshrl.u32 %v1326, 7
    %v1328 = vsub.s32 3, %v1327
    %v1329 = vrot.slane %v791, %v1328
    %v1330 = vlaneseq
    %v1331 = vshrl.u32 %v1330, 7
    %v1332 = vsub.s32 7, %v1331
    %v1333 = vrot.slane %v791, %v1332
    %v1334 = vlaneseq
    %v1335 = vshrl.u32 %v1334, 7
    %v1336 = vsub.s32 3, %v1335
    %v1337 = vrot.slane %v792, %v1336
    %v1338 = vlaneseq
    %v1339 = vshrl.u32 %v1338, 7
    %v1340 = vsub.s32 7, %v1339
    %v1341 = vrot.slane %v792, %v1340
    %v1342 = vlaneseq
    %v1343 = vshrl.u32 %v1342, 7
    %v1344 = vsub.s32 3, %v1343
    %v1345 = vrot.slane %v793, %v1344
    %v1346 = vlaneseq
    %v1347 = vshrl.u32 %v1346, 7
    %v1348 = vsub.s32 7, %v1347
    %v1349 = vrot.slane %v793, %v1348
    %v1350 = vlaneseq
    %v1351 = vshrl.u32 %v1350, 7
    %v1352 = vsub.s32 3, %v1351
    %v1353 = vrot.slane %v794, %v1352
    %v1354 = vlaneseq
    %v1355 = vshrl.u32 %v1354, 7
    %v1356 = vsub.s32 7, %v1355
    %v1357 = vrot.slane %v794, %v1356
    %v1358 = vlaneseq
    %v1359 = vshrl.u32 %v1358, 7
    %v1360 = vsub.s32 3, %v1359
    %v1361 = vrot.slane %v795, %v1360
    %v1362 = vlaneseq
    %v1363 = vshrl.u32 %v1362, 7
    %v1364 = vsub.s32 7, %v1363
    %v1365 = vrot.slane %v795, %v1364
    %v1366 = vlaneseq
    %v1367 = vshrl.u32 %v1366, 7
    %v1368 = vsub.s32 3, %v1367
    %v1369 = vrot.slane %v796, %v1368
    %v1370 = vlaneseq
    %v1371 = vshrl.u32 %v1370, 7
    %v1372 = vsub.s32 7, %v1371
    %v1373 = vrot.slane %v796, %v1372
    %v1374 = vlaneseq
    %v1375 = vshrl.u32 %v1374, 7
    %v1376 = vsub.s32 3, %v1375
    %v1377 = vrot.slane %v797, %v1376
    %v1378 = vlaneseq
    %v1379 = vshrl.u32 %v1378, 7
    %v1380 = vsub.s32 7, %v1379
    %v1381 = vrot.slane %v797, %v1380
    %v1398 = vlaneseq
    %v1399 = vshrl.u32 %v1398, 7
    %v1400 = vsub.s32 3, %v1399
    %v1401 = vrot.slane %v1321, %v1400
    %v1402 = vlaneseq
    %v1403 = vshrl.u32 %v1402, 7
    %v1404 = vsub.s32 3, %v1403
    %v1405 = vrot.slane %v1325, %v1404
    %v1406 = vlaneseq
    %v1407 = vshrl.u32 %v1406, 7
    %v1408 = vsub.s32 3, %v1407
    %v1409 = vrot.slane %v1329, %v1408
    %v1410 = vlaneseq
    %v1411 = vshrl.u32 %v1410, 7
    %v1412 = vsub.s32 3, %v1411
    %v1413 = vrot.slane %v1333, %v1412
    %v1414 = vlaneseq
    %v1415 = vshrl.u32 %v1414, 7
    %v1416 = vsub.s32 3, %v1415
    %v1417 = vrot.slane %v1337, %v1416
    %v1418 = vlaneseq
    %v1419 = vshrl.u32 %v1418, 7
    %v1420 = vsub.s32 3, %v1419
    %v1421 = vrot.slane %v1341, %v1420
    %v1422 = vlaneseq
    %v1423 = vshrl.u32 %v1422, 7
    %v1424 = vsub.s32 3, %v1423
    %v1425 = vrot.slane %v1345, %v1424
    %v1426 = vlaneseq
    %v1427 = vshrl.u32 %v1426, 7
    %v1428 = vsub.s32 3, %v1427
    %v1429 = vrot.slane %v1349, %v1428
    %v1430 = vlaneseq
    %v1431 = vshrl.u32 %v1430, 7
    %v1432 = vsub.s32 3, %v1431
    %v1433 = vrot.slane %v1353, %v1432
    %v1434 = vlaneseq
    %v1435 = vshrl.u32 %v1434, 7
    %v1436 = vsub.s32 3, %v1435
    %v1437 = vrot.slane %v1357, %v1436
    %v1438 = vlaneseq
    %v1439 = vshrl.u32 %v1438, 7
    %v1440 = vsub.s32 3, %v1439
    %v1441 = vrot.slane %v1361, %v1440
    %v1442 = vlaneseq
    %v1443 = vshrl.u32 %v1442, 7
    %v1444 = vsub.s32 3, %v1443
    %v1445 = vrot.slane %v1365, %v1444
    %v1446 = vlaneseq
    %v1447 = vshrl.u32 %v1446, 7
    %v1448 = vsub.s32 3, %v1447
    %v1449 = vrot.slane %v1369, %v1448
    %v1450 = vlaneseq
    %v1451 = vshrl.u32 %v1450, 7
    %v1452 = vsub.s32 3, %v1451
    %v1453 = vrot.slane %v1373, %v1452
    %v1454 = vlaneseq
    %v1455 = vshrl.u32 %v1454, 7
    %v1456 = vsub.s32 3, %v1455
    %v1457 = vrot.slane %v1377, %v1456
    %v1458 = vlaneseq
    %v1459 = vshrl.u32 %v1458, 7
    %v1460 = vsub.s32 3, %v1459
    %v1461 = vrot.slane %v1381, %v1460
    %v1462 = vmul.f32 %v576, %v1401
    %v1463 = vmul.f32 %v576, %v1405
    %v1464 = vmul.f32 %v576, %v1409
    %v1465 = vmul.f32 %v576, %v1413
    %v1466 = vmul.f32 %v576, %v1417
    %v1467 = vmul.f32 %v576, %v1421
    %v1468 = vmul.f32 %v576, %v1425
    %v1469 = vmul.f32 %v576, %v1429
    %v1470 = vmul.f32 %v576, %v1433
    %v1471 = vmul.f32 %v576, %v1437
    %v1472 = vmul.f32 %v576, %v1441
    %v1473 = vmul.f32 %v576, %v1445
    %v1474 = vmul.f32 %v576, %v1449
    %v1475 = vmul.f32 %v576, %v1453
    %v1476 = vmul.f32 %v576, %v1457
    %v1477 = vmul.f32 %v576, %v1461
    %v1478 = vadd.f32 %v1302, %v1462
    %v1479 = vadd.f32 %v1303, %v1463
    %v1480 = vadd.f32 %v1304, %v1464
    %v1481 = vadd.f32 %v1305, %v1465
    %v1482 = vadd.f32 %v1306, %v1466
    %v1483 = vadd.f32 %v1307, %v1467
    %v1484 = vadd.f32 %v1308, %v1468
    %v1485 = vadd.f32 %v1309, %v1469
    %v1486 = vadd.f32 %v1310, %v1470
    %v1487 = vadd.f32 %v1311, %v1471
    %v1488 = vadd.f32 %v1312, %v1472
    %v1489 = vadd.f32 %v1313, %v1473
    %v1490 = vadd.f32 %v1314, %v1474
    %v1491 = vadd.f32 %v1315, %v1475
    %v1492 = vadd.f32 %v1316, %v1476
    %v1493 = vadd.f32 %v1317, %v1477
    %v1494 = vsel %vm754, %v1478, 0.0
    %v1495 = vsel %vm754, %v1479, 0.0
    %v1496 = vadd.f32 %v1494, %v1495
    %v1497 = vsel %vm754, %v1480, 0.0
    %v1498 = vadd.f32 %v1496, %v1497
    %v1499 = vsel %vm754, %v1481, 0.0
    %v1500 = vadd.f32 %v1498, %v1499
    %v1501 = vsel %vm754, %v1482, 0.0
    %v1502 = vadd.f32 %v1500, %v1501
    %v1503 = vsel %vm754, %v1483, 0.0
    %v1504 = vadd.f32 %v1502, %v1503
    %v1505 = vsel %vm754, %v1484, 0.0
    %v1506 = vadd.f32 %v1504, %v1505
    %v1507 = vsel %vm754, %v1485, 0.0
    %v1508 = vadd.f32 %v1506, %v1507
    %v1509 = vsel %vm754, %v1486, 0.0
    %v1510 = vadd.f32 %v1508, %v1509
    %v1511 = vsel %vm754, %v1487, 0.0
    %v1512 = vadd.f32 %v1510, %v1511
    %v1513 = vsel %vm754, %v1488, 0.0
    %v1514 = vadd.f32 %v1512, %v1513
    %v1515 = vsel %vm754, %v1489, 0.0
    %v1516 = vadd.f32 %v1514, %v1515
    %v1517 = vsel %vm754, %v1490, 0.0
    %v1518 = vadd.f32 %v1516, %v1517
    %v1519 = vsel %vm754, %v1491, 0.0
    %v1520 = vadd.f32 %v1518, %v1519
    %v1521 = vsel %vm754, %v1492, 0.0
    %v1522 = vadd.f32 %v1520, %v1521
    %v1523 = vsel %vm754, %v1493, 0.0
    %v1524 = vadd.f32 %v1522, %v1523
    %1525 = vadd.xlane.f32.xlu0 %v1524
    %v1526 = vpop.xlane.xlu0 %1525
    %v1527 = vadd.f32 %v788, %v1526
    %v1528 = vmul.f32 %v1527, 0.00024414063
    %v1529 = vsub.f32 %v738, %v1528
    %v1530 = vsub.f32 %v739, %v1528
    %v1531 = vsub.f32 %v740, %v1528
    %v1532 = vsub.f32 %v741, %v1528
    %v1533 = vsub.f32 %v742, %v1528
    %v1534 = vsub.f32 %v743, %v1528
    %v1535 = vsub.f32 %v744, %v1528
    %v1536 = vsub.f32 %v745, %v1528
    %v1537 = vsub.f32 %v746, %v1528
    %v1538 = vsub.f32 %v747, %v1528
    %v1539 = vsub.f32 %v748, %v1528
    %v1540 = vsub.f32 %v749, %v1528
    %v1541 = vsub.f32 %v750, %v1528
    %v1542 = vsub.f32 %v751, %v1528
    %v1543 = vsub.f32 %v752, %v1528
    %v1544 = vsub.f32 %v753, %v1528
    %v1545 = vmul.f32 %v1529, %v1529
    %v1546 = vmul.f32 %v1530, %v1530
    %v1547 = vmul.f32 %v1531, %v1531
    %v1548 = vmul.f32 %v1532, %v1532
    %v1549 = vmul.f32 %v1533, %v1533
    %v1550 = vmul.f32 %v1534, %v1534
    %v1551 = vmul.f32 %v1535, %v1535
    %v1552 = vmul.f32 %v1536, %v1536
    %v1553 = vmul.f32 %v1537, %v1537
    %v1554 = vmul.f32 %v1538, %v1538
    %v1555 = vmul.f32 %v1539, %v1539
    %v1556 = vmul.f32 %v1540, %v1540
    %v1557 = vmul.f32 %v1541, %v1541
    %v1558 = vmul.f32 %v1542, %v1542
    %v1559 = vmul.f32 %v1543, %v1543
    %v1560 = vmul.f32 %v1544, %v1544
    %v1561 = vsel %vm754, %v1545, 0.0
    %v1562 = vsel %vm754, %v1546, 0.0
    %v1563 = vadd.f32 %v1561, %v1562
    %v1564 = vsel %vm754, %v1547, 0.0
    %v1565 = vadd.f32 %v1563, %v1564
    %v1566 = vsel %vm754, %v1548, 0.0
    %v1567 = vadd.f32 %v1565, %v1566
    %v1568 = vsel %vm754, %v1549, 0.0
    %v1569 = vadd.f32 %v1567, %v1568
    %v1570 = vsel %vm754, %v1550, 0.0
    %v1571 = vadd.f32 %v1569, %v1570
    %v1572 = vsel %vm754, %v1551, 0.0
    %v1573 = vadd.f32 %v1571, %v1572
    %v1574 = vsel %vm754, %v1552, 0.0
    %v1575 = vadd.f32 %v1573, %v1574
    %v1576 = vsel %vm754, %v1553, 0.0
    %v1577 = vadd.f32 %v1575, %v1576
    %v1578 = vsel %vm754, %v1554, 0.0
    %v1579 = vadd.f32 %v1577, %v1578
    %v1580 = vsel %vm754, %v1555, 0.0
    %v1581 = vadd.f32 %v1579, %v1580
    %v1582 = vsel %vm754, %v1556, 0.0
    %v1583 = vadd.f32 %v1581, %v1582
    %v1584 = vsel %vm754, %v1557, 0.0
    %v1585 = vadd.f32 %v1583, %v1584
    %v1586 = vsel %vm754, %v1558, 0.0
    %v1587 = vadd.f32 %v1585, %v1586
    %v1588 = vsel %vm754, %v1559, 0.0
    %v1589 = vadd.f32 %v1587, %v1588
    %v1590 = vsel %vm754, %v1560, 0.0
    %v1591 = vadd.f32 %v1589, %v1590
    %1592 = vadd.xlane.f32.xlu0 %v1591
    %v1593 = vpop.xlane.xlu0 %1592
    %v1594 = vadd.f32 %v1593, 0.0
    %v1595 = vsub.f32 %v1478, %v1528
    %v1596 = vsub.f32 %v1479, %v1528
    %v1597 = vsub.f32 %v1480, %v1528
    %v1598 = vsub.f32 %v1481, %v1528
    %v1599 = vsub.f32 %v1482, %v1528
    %v1600 = vsub.f32 %v1483, %v1528
    %v1601 = vsub.f32 %v1484, %v1528
    %v1602 = vsub.f32 %v1485, %v1528
    %v1603 = vsub.f32 %v1486, %v1528
    %v1604 = vsub.f32 %v1487, %v1528
    %v1605 = vsub.f32 %v1488, %v1528
    %v1606 = vsub.f32 %v1489, %v1528
    %v1607 = vsub.f32 %v1490, %v1528
    %v1608 = vsub.f32 %v1491, %v1528
    %v1609 = vsub.f32 %v1492, %v1528
    %v1610 = vsub.f32 %v1493, %v1528
    %v1611 = vmul.f32 %v1595, %v1595
    %v1612 = vmul.f32 %v1596, %v1596
    %v1613 = vmul.f32 %v1597, %v1597
    %v1614 = vmul.f32 %v1598, %v1598
    %v1615 = vmul.f32 %v1599, %v1599
    %v1616 = vmul.f32 %v1600, %v1600
    %v1617 = vmul.f32 %v1601, %v1601
    %v1618 = vmul.f32 %v1602, %v1602
    %v1619 = vmul.f32 %v1603, %v1603
    %v1620 = vmul.f32 %v1604, %v1604
    %v1621 = vmul.f32 %v1605, %v1605
    %v1622 = vmul.f32 %v1606, %v1606
    %v1623 = vmul.f32 %v1607, %v1607
    %v1624 = vmul.f32 %v1608, %v1608
    %v1625 = vmul.f32 %v1609, %v1609
    %v1626 = vmul.f32 %v1610, %v1610
    %v1627 = vsel %vm754, %v1611, 0.0
    %v1628 = vsel %vm754, %v1612, 0.0
    %v1629 = vadd.f32 %v1627, %v1628
    %v1630 = vsel %vm754, %v1613, 0.0
    %v1631 = vadd.f32 %v1629, %v1630
    %v1632 = vsel %vm754, %v1614, 0.0
    %v1633 = vadd.f32 %v1631, %v1632
    %v1634 = vsel %vm754, %v1615, 0.0
    %v1635 = vadd.f32 %v1633, %v1634
    %v1636 = vsel %vm754, %v1616, 0.0
    %v1637 = vadd.f32 %v1635, %v1636
    %v1638 = vsel %vm754, %v1617, 0.0
    %v1639 = vadd.f32 %v1637, %v1638
    %v1640 = vsel %vm754, %v1618, 0.0
    %v1641 = vadd.f32 %v1639, %v1640
    %v1642 = vsel %vm754, %v1619, 0.0
    %v1643 = vadd.f32 %v1641, %v1642
    %v1644 = vsel %vm754, %v1620, 0.0
    %v1645 = vadd.f32 %v1643, %v1644
    %v1646 = vsel %vm754, %v1621, 0.0
    %v1647 = vadd.f32 %v1645, %v1646
    %v1648 = vsel %vm754, %v1622, 0.0
    %v1649 = vadd.f32 %v1647, %v1648
    %v1650 = vsel %vm754, %v1623, 0.0
    %v1651 = vadd.f32 %v1649, %v1650
    %v1652 = vsel %vm754, %v1624, 0.0
    %v1653 = vadd.f32 %v1651, %v1652
    %v1654 = vsel %vm754, %v1625, 0.0
    %v1655 = vadd.f32 %v1653, %v1654
    %v1656 = vsel %vm754, %v1626, 0.0
    %v1657 = vadd.f32 %v1655, %v1656
    %1658 = vadd.xlane.f32.xlu0 %v1657
    %v1659 = vpop.xlane.xlu0 %1658
    %v1660 = vadd.f32 %v1594, %v1659
    %v1661 = vmul.f32 %v1660, 0.00024414063
    %v1662 = vadd.f32 %v1661, 1e-05
    %v1663 = vrsqrt.pop %v1662
    %v1664 = vld [vmem:[%s2] sm:$0xf]
    %v1665 = vmul.f32 %v1663, %v1664
    %v1666 = vld [vmem:[%s3] sm:$0xf]
    %v1667 = vmul.f32 %v1528, %v1665
    %v1668 = vsub.f32 %v1666, %v1667
    %1670 = vset.pattern.permute.xlu0 0
    %1671 = vperm.xlu0 %1670, %v1665
    %v1672 = vpop.permute.xlu0 %1671
    %v1674 = vmul.f32 %v738, %v1672
    %v1675 = vmul.f32 %v739, %v1672
    %v1676 = vmul.f32 %v740, %v1672
    %v1677 = vmul.f32 %v741, %v1672
    %v1678 = vmul.f32 %v742, %v1672
    %v1679 = vmul.f32 %v743, %v1672
    %v1680 = vmul.f32 %v744, %v1672
    %v1681 = vmul.f32 %v745, %v1672
    %v1682 = vmul.f32 %v746, %v1672
    %v1683 = vmul.f32 %v747, %v1672
    %v1684 = vmul.f32 %v748, %v1672
    %v1685 = vmul.f32 %v749, %v1672
    %v1686 = vmul.f32 %v750, %v1672
    %v1687 = vmul.f32 %v751, %v1672
    %v1688 = vmul.f32 %v752, %v1672
    %v1689 = vmul.f32 %v753, %v1672
    %1691 = vset.pattern.permute.xlu0 0
    %1692 = vperm.xlu0 %1691, %v1668
    %v1693 = vpop.permute.xlu0 %1692
    %v1695 = vadd.f32 %v1674, %v1693
    %v1696 = vadd.f32 %v1675, %v1693
    %v1697 = vadd.f32 %v1676, %v1693
    %v1698 = vadd.f32 %v1677, %v1693
    %v1699 = vadd.f32 %v1678, %v1693
    %v1700 = vadd.f32 %v1679, %v1693
    %v1701 = vadd.f32 %v1680, %v1693
    %v1702 = vadd.f32 %v1681, %v1693
    %v1703 = vadd.f32 %v1682, %v1693
    %v1704 = vadd.f32 %v1683, %v1693
    %v1705 = vadd.f32 %v1684, %v1693
    %v1706 = vadd.f32 %v1685, %v1693
    %v1707 = vadd.f32 %v1686, %v1693
    %v1708 = vadd.f32 %v1687, %v1693
    %v1709 = vadd.f32 %v1688, %v1693
    %v1710 = vadd.f32 %v1689, %v1693
    %v1711 = vcombine.high %v33, %v33
    %v1712 = vcombine.high %v34, %v34
    %v1713 = vcombine.high %v35, %v35
    %v1714 = vcombine.high %v36, %v36
    %v1715 = vcombine.high %v37, %v37
    %v1716 = vcombine.high %v38, %v38
    %v1717 = vcombine.high %v39, %v39
    %v1718 = vcombine.high %v40, %v40
    %v1727 = vadd.f32 %v1695, %v33
    %v1728 = vadd.f32 %v1696, %v1711
    %v1729 = vadd.f32 %v1697, %v34
    %v1730 = vadd.f32 %v1698, %v1712
    %v1731 = vadd.f32 %v1699, %v35
    %v1732 = vadd.f32 %v1700, %v1713
    %v1733 = vadd.f32 %v1701, %v36
    %v1734 = vadd.f32 %v1702, %v1714
    %v1735 = vadd.f32 %v1703, %v37
    %v1736 = vadd.f32 %v1704, %v1715
    %v1737 = vadd.f32 %v1705, %v38
    %v1738 = vadd.f32 %v1706, %v1716
    %v1739 = vadd.f32 %v1707, %v39
    %v1740 = vadd.f32 %v1708, %v1717
    %v1741 = vadd.f32 %v1709, %v40
    %v1742 = vadd.f32 %v1710, %v1718
    %v1743 = vmax.f32 %v1727, 0.0
    %v1744 = vmax.f32 %v1728, 0.0
    %v1745 = vmax.f32 %v1729, 0.0
    %v1746 = vmax.f32 %v1730, 0.0
    %v1747 = vmax.f32 %v1731, 0.0
    %v1748 = vmax.f32 %v1732, 0.0
    %v1749 = vmax.f32 %v1733, 0.0
    %v1750 = vmax.f32 %v1734, 0.0
    %v1751 = vmax.f32 %v1735, 0.0
    %v1752 = vmax.f32 %v1736, 0.0
    %v1753 = vmax.f32 %v1737, 0.0
    %v1754 = vmax.f32 %v1738, 0.0
    %v1755 = vmax.f32 %v1739, 0.0
    %v1756 = vmax.f32 %v1740, 0.0
    %v1757 = vmax.f32 %v1741, 0.0
    %v1758 = vmax.f32 %v1742, 0.0
    %v1775 = vcombine.low %v1743, %v1744
    %v1776 = vcombine.low %v1745, %v1746
    %v1777 = vcombine.low %v1747, %v1748
    %v1778 = vcombine.low %v1749, %v1750
    %v1779 = vcombine.low %v1751, %v1752
    %v1780 = vcombine.low %v1753, %v1754
    %v1781 = vcombine.low %v1755, %v1756
    %v1782 = vcombine.low %v1757, %v1758
    %1791 = vst [vmem:[#allocation5] sm:$0xff] %v1775
    %1792 = vst [vmem:[#allocation5 + $0x8] sm:$0xff] %v1776
    %1793 = vst [vmem:[#allocation5 + $0x10] sm:$0xff] %v1777
    %1794 = vst [vmem:[#allocation5 + $0x18] sm:$0xff] %v1778
    %1795 = vst [vmem:[#allocation5 + $0x20] sm:$0xff] %v1779
    %1796 = vst [vmem:[#allocation5 + $0x28] sm:$0xff] %v1780
    %1797 = vst [vmem:[#allocation5 + $0x30] sm:$0xff] %v1781
    %1798 = vst [vmem:[#allocation5 + $0x38] sm:$0xff] %v1782
    %v1799 = vmul.f32 %v1478, %v1672
    %v1800 = vmul.f32 %v1479, %v1672
    %v1801 = vmul.f32 %v1480, %v1672
    %v1802 = vmul.f32 %v1481, %v1672
    %v1803 = vmul.f32 %v1482, %v1672
    %v1804 = vmul.f32 %v1483, %v1672
    %v1805 = vmul.f32 %v1484, %v1672
    %v1806 = vmul.f32 %v1485, %v1672
    %v1807 = vmul.f32 %v1486, %v1672
    %v1808 = vmul.f32 %v1487, %v1672
    %v1809 = vmul.f32 %v1488, %v1672
    %v1810 = vmul.f32 %v1489, %v1672
    %v1811 = vmul.f32 %v1490, %v1672
    %v1812 = vmul.f32 %v1491, %v1672
    %v1813 = vmul.f32 %v1492, %v1672
    %v1814 = vmul.f32 %v1493, %v1672
    %v1815 = vadd.f32 %v1799, %v1693
    %v1816 = vadd.f32 %v1800, %v1693
    %v1817 = vadd.f32 %v1801, %v1693
    %v1818 = vadd.f32 %v1802, %v1693
    %v1819 = vadd.f32 %v1803, %v1693
    %v1820 = vadd.f32 %v1804, %v1693
    %v1821 = vadd.f32 %v1805, %v1693
    %v1822 = vadd.f32 %v1806, %v1693
    %v1823 = vadd.f32 %v1807, %v1693
    %v1824 = vadd.f32 %v1808, %v1693
    %v1825 = vadd.f32 %v1809, %v1693
    %v1826 = vadd.f32 %v1810, %v1693
    %v1827 = vadd.f32 %v1811, %v1693
    %v1828 = vadd.f32 %v1812, %v1693
    %v1829 = vadd.f32 %v1813, %v1693
    %v1830 = vadd.f32 %v1814, %v1693
    %v1831 = vld [vmem:[%s789] sm:$0xff]
    %v1832 = vld [vmem:[%s789 + $0x8] sm:$0xff]
    %v1833 = vld [vmem:[%s789 + $0x10] sm:$0xff]
    %v1834 = vld [vmem:[%s789 + $0x18] sm:$0xff]
    %v1835 = vld [vmem:[%s789 + $0x20] sm:$0xff]
    %v1836 = vld [vmem:[%s789 + $0x28] sm:$0xff]
    %v1837 = vld [vmem:[%s789 + $0x30] sm:$0xff]
    %v1838 = vld [vmem:[%s789 + $0x38] sm:$0xff]
    %v1847 = vcombine.high %v1831, %v1831
    %v1848 = vcombine.high %v1832, %v1832
    %v1849 = vcombine.high %v1833, %v1833
    %v1850 = vcombine.high %v1834, %v1834
    %v1851 = vcombine.high %v1835, %v1835
    %v1852 = vcombine.high %v1836, %v1836
    %v1853 = vcombine.high %v1837, %v1837
    %v1854 = vcombine.high %v1838, %v1838
    %v1863 = vadd.f32 %v1815, %v1831
    %v1864 = vadd.f32 %v1816, %v1847
    %v1865 = vadd.f32 %v1817, %v1832
    %v1866 = vadd.f32 %v1818, %v1848
    %v1867 = vadd.f32 %v1819, %v1833
    %v1868 = vadd.f32 %v1820, %v1849
    %v1869 = vadd.f32 %v1821, %v1834
    %v1870 = vadd.f32 %v1822, %v1850
    %v1871 = vadd.f32 %v1823, %v1835
    %v1872 = vadd.f32 %v1824, %v1851
    %v1873 = vadd.f32 %v1825, %v1836
    %v1874 = vadd.f32 %v1826, %v1852
    %v1875 = vadd.f32 %v1827, %v1837
    %v1876 = vadd.f32 %v1828, %v1853
    %v1877 = vadd.f32 %v1829, %v1838
    %v1878 = vadd.f32 %v1830, %v1854
    %v1879 = vmax.f32 %v1863, 0.0
    %v1880 = vmax.f32 %v1864, 0.0
    %v1881 = vmax.f32 %v1865, 0.0
    %v1882 = vmax.f32 %v1866, 0.0
    %v1883 = vmax.f32 %v1867, 0.0
    %v1884 = vmax.f32 %v1868, 0.0
    %v1885 = vmax.f32 %v1869, 0.0
    %v1886 = vmax.f32 %v1870, 0.0
    %v1887 = vmax.f32 %v1871, 0.0
    %v1888 = vmax.f32 %v1872, 0.0
    %v1889 = vmax.f32 %v1873, 0.0
    %v1890 = vmax.f32 %v1874, 0.0
    %v1891 = vmax.f32 %v1875, 0.0
    %v1892 = vmax.f32 %v1876, 0.0
    %v1893 = vmax.f32 %v1877, 0.0
    %v1894 = vmax.f32 %v1878, 0.0
    %v1911 = vcombine.low %v1879, %v1880
    %v1912 = vcombine.low %v1881, %v1882
    %v1913 = vcombine.low %v1883, %v1884
    %v1914 = vcombine.low %v1885, %v1886
    %v1915 = vcombine.low %v1887, %v1888
    %v1916 = vcombine.low %v1889, %v1890
    %v1917 = vcombine.low %v1891, %v1892
    %v1918 = vcombine.low %v1893, %v1894
    %s1927 = scalar_lea.vmem [#allocation5], 64
    %1928 = vst [vmem:[%s1927] sm:$0xff] %v1911
    %1929 = vst [vmem:[%s1927 + $0x8] sm:$0xff] %v1912
    %1930 = vst [vmem:[%s1927 + $0x10] sm:$0xff] %v1913
    %1931 = vst [vmem:[%s1927 + $0x18] sm:$0xff] %v1914
    %1932 = vst [vmem:[%s1927 + $0x20] sm:$0xff] %v1915
    %1933 = vst [vmem:[%s1927 + $0x28] sm:$0xff] %v1916
    %1934 = vst [vmem:[%s1927 + $0x30] sm:$0xff] %v1917
    %1935 = vst [vmem:[%s1927 + $0x38] sm:$0xff] %v1918
    // Predicated region
    $region22: #{tpu_custom_call.1} parent=1 // pred_check
      _
    $region23: #{tpu_custom_call.1} parent=1 // pred_check_branch
      %1937 = sbr.rel (0) target = $region25
    $region24: #{tpu_custom_call.1} parent=1 // pred_region
      %s1939 = ssub.s32 2048, 2048
      %1940 = vsyncadd [#allocation4], %s1939
      %s1941 = sshll.u32 [#allocation5], 4
      %s1942 = int_to_ptr.vmem [resolvable:$true] %s1941
      %1947 = dma.vmem_to_hbm [thread:$0]  %s1942, 2048, %s4, [#allocation4], 1024, 1024, 64
    $region25: #{tpu_custom_call.1} parent=1 // pred_fallthru
      _
    // Predicated region
    $region26: #{tpu_custom_call.1} parent=1 // pred_check
      _
    $region27: #{tpu_custom_call.1} parent=1 // pred_check_branch
      %1949 = sbr.rel (0) target = $region29
    $region28: #{tpu_custom_call.1} parent=1 // pred_region
      %1950 = dma.done [#allocation4], 2048
    $region29: #{tpu_custom_call.1} parent=1 // pred_fallthru
      _
    %1951 = vsyncpa [#allocation3], 1
    %1952 = vsyncpa [#allocation4], 1

</llo_original>
